<compile_context>
chip_gen: v6e
topology: v6e:2x2x1
jax: 0.10.0
libtpu: 0.0.40
codegen_flags: <defaults>
</compile_context>

<pallas_src>
import functools

import jax
import jax.numpy as jnp
from jax import lax
from jax.experimental import pallas as pl
from jax.experimental.pallas import tpu as pltpu


def _lane_shift(x, k, size):
    """result[..., i] = x[..., (i + k) % size] along the last (lane) axis."""
    k = k % size
    if k == 0:
        return x
    # pltpu.roll follows np.roll semantics: roll(x, s)[i] = x[(i - s) % n].
    return pltpu.roll(x, size - k, axis=x.ndim - 1)


def _make_loss_kernel(tb, S, b_total, *, max_gradient_threshold, gradient_weight,
                      homogeneous_penalty, transition_penalty,
                      window_size, variance_threshold, use_zones):
    """Builds the per-tile kernel, closed over static shapes / hyper-parameters."""
    w_mse = 1.0 / float(b_total * S)
    if S > 1:
        nd = float(b_total * (S - 1))
        w_pat = 0.3 / nd
        w_hom = (gradient_weight * homogeneous_penalty) / nd
        w_trn = (gradient_weight * transition_penalty) / nd

    def body(pred_ref, true_ref, w_ref, out_ref):
        pred = pred_ref[...].astype(jnp.float32)   # (tb, S)
        true = true_ref[...].astype(jnp.float32)   # (tb, S)

        # ---- MSE term (mean denominator folded into the static weight) ------
        d = pred - true
        combined = w_mse * (d * d)

        if S > 1:
            # Edge masks built once at (1, S); the jnp.where's broadcast.
            lane = lax.broadcasted_iota(jnp.int32, (1, S), 1)
            dmask = lane < (S - 1)

            # ---- first differences via lane rotation + edge mask ------------
            pd = jnp.where(dmask, jnp.abs(_lane_shift(pred, 1, S) - pred), 0.0)
            td = jnp.where(dmask, jnp.abs(_lane_shift(true, 1, S) - true), 0.0)

            pat = pd - td
            combined = combined + w_pat * (pat * pat)

            # ---- zone detection: sliding-window variance on the MXU ---------
            if use_zones:
                L = S - window_size + 1
                # Center by the row mean so the one-pass variance formula stays
                # numerically close to torch's two-pass unbiased variance
                # (it only feeds a threshold mask).
                tc = true - jnp.mean(true, axis=1, keepdims=True)
                w = w_ref[...]                      # (S, S) banded ones, resident
                # Window sums on the otherwise-idle MXU; HIGHEST precision keeps
                # the f32 result exact enough for the threshold compare.
                sum_x = jnp.dot(tc, w, preferred_element_type=jnp.float32,
                                precision=lax.Precision.HIGHEST)
                sum_x2 = jnp.dot(tc * tc, w, preferred_element_type=jnp.float32,
                                 precision=lax.Precision.HIGHEST)
                var = (sum_x2 - (sum_x * sum_x) * (1.0 / window_size)) * (
                    1.0 / (window_size - 1))        # unbiased (torch default)
                # Keep this clamp coupled with the 0.0 fill in the max below.
                var = jnp.maximum(var, 0.0)         # valid at lanes [0, L)

                # per-row max over the valid windows only
                max_var = jnp.max(jnp.where(lane < L, var, 0.0),
                                  axis=1, keepdims=True)             # (tb, 1)

                # replicate padding without a lane-axis concatenate
                pad_left = window_size // 2
                pad_right = window_size - pad_left - 1
                center = _lane_shift(var, -pad_left, S)      # var[i - pad_left]
                left_edge = var[:, 0:1]                      # var[:, 0]
                right_edge = var[:, L - 1:L]                 # var[:, L-1]
                padded = jnp.where(
                    lane < pad_left, left_edge,
                    jnp.where(lane >= S - pad_right, right_edge, center))

                # padded/(max+eps) < vt  <=>  padded < vt*(max+eps)  (pos. denom)
                homo = (padded < variance_threshold * (max_var + 1e-8)
                        ).astype(jnp.float32)
                # zone_masks = homogeneous_zones[:, 1:]; garbage at lane S-1 is
                # killed by pd == 0 there.
                zone = _lane_shift(homo, 1, S)
            else:
                zone = jnp.zeros((tb, S), jnp.float32)

            # ---- homogeneous-zone gradient penalty ---------------------------
            hg = pd * zone
            combined = combined + w_hom * (hg * hg)

            # ---- transition-zone excess-gradient penalty ---------------------
            tg = pd - hg                            # == pd * (1 - zone), zone in {0,1}
            thr = jnp.maximum(td, max_gradient_threshold)
            ex = jnp.maximum(tg - thr, 0.0)
            combined = combined + w_trn * (ex * ex)

        # Single fused reduction -> lane-dense per-tile partial-sum block.
        partial = jnp.sum(combined)
        out_ref[...] = jnp.broadcast_to(partial, out_ref.shape)

    if use_zones:
        def kernel(pred_ref, true_ref, w_ref, out_ref):
            body(pred_ref, true_ref, w_ref, out_ref)
    else:
        def kernel(pred_ref, true_ref, out_ref):
            body(pred_ref, true_ref, None, out_ref)
    return kernel


def _choose_tile_rows(S):
    # ~2 MiB per (tb, S) f32 intermediate: the handful of live temps plus the
    # double-buffered input tiles stay inside v7x's 64 MiB physical VMEM while
    # the tile is large enough to amortize the ~0.35 us per-grid-step overhead.
    rows = (2 << 20) // max(1, 4 * S)
    return max(8, (rows // 8) * 8)


@functools.partial(jax.jit, static_argnames=(
    "max_gradient_threshold", "gradient_weight", "homogeneous_penalty",
    "transition_penalty", "window_size", "variance_threshold"))
def adaptive_gradient_constraint_loss(impedance_pred, impedance_true,
                                      max_gradient_threshold=0.15,
                                      gradient_weight=0.1,
                                      homogeneous_penalty=2.0,
                                      transition_penalty=0.5,
                                      window_size=10,
                                      variance_threshold=0.1):
    pred = impedance_pred   # keep native dtype; cast to f32 inside the kernel
    true = impedance_true
    if pred.ndim == 1:      # matches the torch seq_len == 1 handling
        pred = pred[:, None]
        true = true[:, None]
    B, S = pred.shape

    tb = _choose_tile_rows(S)
    if B <= tb:
        if B >= 16:
            # v7x megacore: force >= 2 grid steps so the "parallel" axis can
            # shard across both TensorCores (no effect on v5e/v6e).
            half = -(-B // 2)
            tb = max(8, (-(-half // 8)) * 8)
        else:
            tb = B          # single block == full array (exempt from (8,128) rule)
    grid = int(pl.cdiv(B, tb))
    b_pad = grid * tb
    if b_pad != B:          # zero-padded rows contribute exactly 0 to every term
        pred = jnp.pad(pred, ((0, b_pad - B), (0, 0)))
        true = jnp.pad(true, ((0, b_pad - B), (0, 0)))

    use_zones = S > window_size
    kernel = _make_loss_kernel(
        tb, S, B,
        max_gradient_threshold=max_gradient_threshold,
        gradient_weight=gradient_weight,
        homogeneous_penalty=homogeneous_penalty,
        transition_penalty=transition_penalty,
        window_size=window_size,
        variance_threshold=variance_threshold,
        use_zones=use_zones)

    in_specs = [pl.BlockSpec((tb, S), lambda i: (i, 0)),
                pl.BlockSpec((tb, S), lambda i: (i, 0))]
    args = [pred, true]
    if use_zones:
        # Static banded-ones matrix for the sliding-window sums on the MXU.
        # W[j, i] = 1 iff lane j belongs to the window starting at lane i.
        j = jnp.arange(S)[:, None]
        i = jnp.arange(S)[None, :]
        w_mat = ((j >= i) & (j < i + window_size)).astype(jnp.float32)
        in_specs.append(pl.BlockSpec((S, S), lambda i: (0, 0)))  # VMEM-resident
        args.append(w_mat)

    partials = pl.pallas_call(
        kernel,
        out_shape=jax.ShapeDtypeStruct((grid, 8, 128), jnp.float32),
        grid=(grid,),
        in_specs=in_specs,
        out_specs=pl.BlockSpec((1, 8, 128), lambda i: (i, 0, 0)),
        compiler_params=pltpu.CompilerParams(
            dimension_semantics=("parallel",),
            vmem_limit_bytes=48 * 1024 * 1024),
    )(*args)
    # Sum the per-tile partial sums (tiny XLA reduction).
    return jnp.sum(partials[:, 0, 0])


# ----------------------------- pure-JAX reference ------------------------------
def _reference_loss(pred, true, max_gradient_threshold=0.15, gradient_weight=0.1,
                    homogeneous_penalty=2.0, transition_penalty=0.5,
                    window_size=10, variance_threshold=0.1):
    pred = pred.astype(jnp.float32)
    true = true.astype(jnp.float32)
    B, S = pred.shape
    mse = jnp.mean((pred - true) ** 2)
    if S == 1:
        return mse
    true_diffs = jnp.abs(true[:, 1:] - true[:, :-1])
    pred_diffs = jnp.abs(pred[:, 1:] - pred[:, :-1])
    pattern = jnp.mean((pred_diffs - true_diffs) ** 2)
    if S <= window_size:
        zone = jnp.zeros((B, S - 1), jnp.float32)
    else:
        L = S - window_size + 1
        windows = jnp.stack([true[:, j:j + L] for j in range(window_size)], axis=2)
        local_var = jnp.var(windows, axis=2, ddof=1)
        pad_left = window_size // 2
        pad_right = window_size - pad_left - 1
        padded = jnp.concatenate(
            [jnp.broadcast_to(local_var[:, :1], (B, pad_left)),
             local_var,
             jnp.broadcast_to(local_var[:, -1:], (B, pad_right))], axis=1)
        max_v = jnp.max(padded, axis=1, keepdims=True)
        zone = (padded / (max_v + 1e-8) < variance_threshold).astype(jnp.float32)[:, 1:]
    homog = jnp.mean((pred_diffs * zone) ** 2) * homogeneous_penalty
    trans = pred_diffs * (1.0 - zone)
    thr = jnp.maximum(true_diffs, max_gradient_threshold)
    excess = jnp.maximum(trans - thr, 0.0)
    transition = jnp.mean(excess ** 2) * transition_penalty
    return mse + pattern * 0.3 + (homog + transition) * gradient_weight


def _make_profile(key, B, S):
    """Piecewise-constant impedance profile + noise: both homogeneous zones
    (mask = 1) and a sharp transition (mask = 0) are present, so every loss
    term is exercised and no variance value sits near the threshold."""
    k1, k2 = jax.random.split(key)
    base = jnp.where(jnp.arange(S) < S // 2, 1.0, 3.0).astype(jnp.float32)
    true = base[None, :] + 0.02 * jax.random.normal(k1, (B, S), dtype=jnp.float32)
    pred = true + 0.05 * jax.random.normal(k2, (B, S), dtype=jnp.float32)
    return pred, true


if __name__ == "__main__":
    key = jax.random.PRNGKey(0)
    k_a, k_b, k_c = jax.random.split(key, 3)

    # Case 1: S > window_size, single tile (zone-detection / MXU path).
    pred_a, true_a = _make_profile(k_a, 4, 128)
    loss_a = jax.block_until_ready(adaptive_gradient_constraint_loss(pred_a, true_a))
    ref_a = _reference_loss(pred_a, true_a)
    assert jnp.allclose(loss_a, ref_a, rtol=5e-5, atol=1e-6), (loss_a, ref_a)

    # Case 2: mid-size batch -> grid >= 2 (v7x megacore split) + row padding.
    pred_b, true_b = _make_profile(k_b, 20, 128)
    loss_b = jax.block_until_ready(adaptive_gradient_constraint_loss(pred_b, true_b))
    ref_b = _reference_loss(pred_b, true_b)
    assert jnp.allclose(loss_b, ref_b, rtol=5e-5, atol=1e-6), (loss_b, ref_b)

    # Case 3: S <= window_size -> zone mask is all zeros.
    pred_c, true_c = _make_profile(k_c, 4, 8)
    loss_c = jax.block_until_ready(adaptive_gradient_constraint_loss(pred_c, true_c))
    ref_c = _reference_loss(pred_c, true_c)
    assert jnp.allclose(loss_c, ref_c, rtol=5e-5, atol=1e-6), (loss_c, ref_c)

    print("KERNEL_OK")
</pallas_src>

<mosaic_0001>
module attributes {stable_mosaic.version = 11 : i64} {
  func.func @kernel(%arg0: i32, %arg1: memref<4x128xf32, #tpu.memory_space<vmem>>, %arg2: memref<4x128xf32, #tpu.memory_space<vmem>>, %arg3: memref<128x128xf32, #tpu.memory_space<vmem>>, %arg4: memref<1x8x128xf32, #tpu.memory_space<vmem>>) attributes {dimension_semantics = [#tpu.dimension_semantics<parallel>], iteration_bounds = array<i64: 1>, scalar_prefetch = 0 : i64, scratch_operands = 0 : i64, tpu.core_type = #tpu.core_type<tc>, window_params = [{transform_indices = @transform_0, window_bounds = array<i64: 4, 128>}, {transform_indices = @transform_1, window_bounds = array<i64: 4, 128>}, {pipeline_mode = #tpu.pipeline_mode<synchronous>, transform_indices = @transform_2, window_bounds = array<i64: 128, 128>}, {transform_indices = @transform_3, window_bounds = array<i64: 1, 8, 128>}]} {
    %c0 = arith.constant 0 : index
    %c0_0 = arith.constant 0 : index
    %0 = vector.load %arg1[%c0, %c0_0] : memref<4x128xf32, #tpu.memory_space<vmem>>, vector<4x128xf32>
    %c0_1 = arith.constant 0 : index
    %c0_2 = arith.constant 0 : index
    %1 = vector.load %arg2[%c0_1, %c0_2] : memref<4x128xf32, #tpu.memory_space<vmem>>, vector<4x128xf32>
    %2 = arith.subf %0, %1 : vector<4x128xf32>
    %3 = arith.mulf %2, %2 : vector<4x128xf32>
    %cst = arith.constant 0.001953125 : f32
    %4 = vector.broadcast %cst : f32 to vector<4x128xf32>
    %5 = arith.mulf %4, %3 : vector<4x128xf32>
    %6 = tpu.iota {dimensions = array<i32: 1>} : vector<1x128xi32>
    %c127_i32 = arith.constant 127 : i32
    %7 = vector.broadcast %c127_i32 : i32 to vector<1x128xi32>
    %8 = arith.cmpi slt, %6, %7 : vector<1x128xi32>
    %c127_i32_3 = arith.constant 127 : i32
    %9 = tpu.dynamic_rotate %0 by %c127_i32_3 dim 1 : vector<4x128xf32>, i32 -> vector<4x128xf32>
    %10 = arith.subf %9, %0 : vector<4x128xf32>
    %11 = math.absf %10 : vector<4x128xf32>
    %cst_4 = arith.constant 0.000000e+00 : f32
    %12 = vector.shape_cast %8 : vector<1x128xi1> to vector<1x128xi1>
    %13 = vector.broadcast %12 : vector<1x128xi1> to vector<4x128xi1>
    %14 = vector.broadcast %cst_4 : f32 to vector<4x128xf32>
    %15 = arith.select %13, %11, %14 : vector<4x128xi1>, vector<4x128xf32>
    %c127_i32_5 = arith.constant 127 : i32
    %16 = tpu.dynamic_rotate %1 by %c127_i32_5 dim 1 : vector<4x128xf32>, i32 -> vector<4x128xf32>
    %17 = arith.subf %16, %1 : vector<4x128xf32>
    %18 = math.absf %17 : vector<4x128xf32>
    %cst_6 = arith.constant 0.000000e+00 : f32
    %19 = vector.shape_cast %8 : vector<1x128xi1> to vector<1x128xi1>
    %20 = vector.broadcast %19 : vector<1x128xi1> to vector<4x128xi1>
    %21 = vector.broadcast %cst_6 : f32 to vector<4x128xf32>
    %22 = arith.select %20, %18, %21 : vector<4x128xi1>, vector<4x128xf32>
    %23 = arith.subf %15, %22 : vector<4x128xf32>
    %24 = arith.mulf %23, %23 : vector<4x128xf32>
    %cst_7 = arith.constant 5.90551179E-4 : f32
    %25 = vector.broadcast %cst_7 : f32 to vector<4x128xf32>
    %26 = arith.mulf %25, %24 : vector<4x128xf32>
    %27 = arith.addf %5, %26 : vector<4x128xf32>
    %cst_8 = arith.constant dense<0.000000e+00> : vector<4xf32>
    %28 = vector.multi_reduction <add>, %1, %cst_8 [1] : vector<4x128xf32> to vector<4xf32>
    %29 = vector.shape_cast %28 : vector<4xf32> to vector<4x1xf32>
    %cst_9 = arith.constant 1.280000e+02 : f32
    %30 = vector.broadcast %cst_9 : f32 to vector<4x1xf32>
    %31 = arith.divf %29, %30 : vector<4x1xf32>
    %32 = vector.broadcast %31 : vector<4x1xf32> to vector<4x128xf32>
    %33 = arith.subf %1, %32 : vector<4x128xf32>
    %c0_10 = arith.constant 0 : index
    %c0_11 = arith.constant 0 : index
    %34 = vector.load %arg3[%c0_10, %c0_11] : memref<128x128xf32, #tpu.memory_space<vmem>>, vector<128x128xf32>
    %cst_12 = arith.constant dense<0.000000e+00> : vector<4x128xf32>
    %35 = tpu.matmul %33, %34, %cst_12 {dimension_numbers = #tpu.dot_dimension_numbers<[1], [0], [0], [1], [0, 0, 1, 1], [], []>, precision = #tpu.contract_precision<fp32>} : vector<4x128xf32>, vector<128x128xf32>, vector<4x128xf32> -> vector<4x128xf32>
    %36 = arith.mulf %33, %33 : vector<4x128xf32>
    %cst_13 = arith.constant dense<0.000000e+00> : vector<4x128xf32>
    %37 = tpu.matmul %36, %34, %cst_13 {dimension_numbers = #tpu.dot_dimension_numbers<[1], [0], [0], [1], [0, 0, 1, 1], [], []>, precision = #tpu.contract_precision<fp32>} : vector<4x128xf32>, vector<128x128xf32>, vector<4x128xf32> -> vector<4x128xf32>
    %38 = arith.mulf %35, %35 : vector<4x128xf32>
    %cst_14 = arith.constant 1.000000e-01 : f32
    %39 = vector.broadcast %cst_14 : f32 to vector<4x128xf32>
    %40 = arith.mulf %38, %39 : vector<4x128xf32>
    %41 = arith.subf %37, %40 : vector<4x128xf32>
    %cst_15 = arith.constant 0.111111112 : f32
    %42 = vector.broadcast %cst_15 : f32 to vector<4x128xf32>
    %43 = arith.mulf %41, %42 : vector<4x128xf32>
    %cst_16 = arith.constant 0.000000e+00 : f32
    %44 = vector.broadcast %cst_16 : f32 to vector<4x128xf32>
    %45 = arith.maximumf %43, %44 : vector<4x128xf32>
    %c119_i32 = arith.constant 119 : i32
    %46 = vector.broadcast %c119_i32 : i32 to vector<1x128xi32>
    %47 = arith.cmpi slt, %6, %46 : vector<1x128xi32>
    %cst_17 = arith.constant 0.000000e+00 : f32
    %48 = vector.shape_cast %47 : vector<1x128xi1> to vector<1x128xi1>
    %49 = vector.broadcast %48 : vector<1x128xi1> to vector<4x128xi1>
    %50 = vector.broadcast %cst_17 : f32 to vector<4x128xf32>
    %51 = arith.select %49, %45, %50 : vector<4x128xi1>, vector<4x128xf32>
    %cst_18 = arith.constant dense<0xFF800000> : vector<4xf32>
    %52 = vector.multi_reduction <maximumf>, %51, %cst_18 [1] : vector<4x128xf32> to vector<4xf32>
    %53 = vector.shape_cast %52 : vector<4xf32> to vector<4x1xf32>
    %c5_i32 = arith.constant 5 : i32
    %54 = tpu.dynamic_rotate %45 by %c5_i32 dim 1 : vector<4x128xf32>, i32 -> vector<4x128xf32>
    %55 = vector.extract_strided_slice %45 {offsets = [0, 0], sizes = [4, 1], strides = [1, 1]} : vector<4x128xf32> to vector<4x1xf32>
    %56 = vector.extract_strided_slice %45 {offsets = [0, 118], sizes = [4, 1], strides = [1, 1]} : vector<4x128xf32> to vector<4x1xf32>
    %c5_i32_19 = arith.constant 5 : i32
    %57 = vector.broadcast %c5_i32_19 : i32 to vector<1x128xi32>
    %58 = arith.cmpi slt, %6, %57 : vector<1x128xi32>
    %c124_i32 = arith.constant 124 : i32
    %59 = vector.broadcast %c124_i32 : i32 to vector<1x128xi32>
    %60 = arith.cmpi sge, %6, %59 : vector<1x128xi32>
    %61 = vector.shape_cast %60 : vector<1x128xi1> to vector<1x128xi1>
    %62 = vector.broadcast %61 : vector<1x128xi1> to vector<4x128xi1>
    %63 = vector.shape_cast %56 : vector<4x1xf32> to vector<4x1xf32>
    %64 = vector.broadcast %63 : vector<4x1xf32> to vector<4x128xf32>
    %65 = arith.select %62, %64, %54 : vector<4x128xi1>, vector<4x128xf32>
    %66 = vector.shape_cast %58 : vector<1x128xi1> to vector<1x128xi1>
    %67 = vector.broadcast %66 : vector<1x128xi1> to vector<4x128xi1>
    %68 = vector.shape_cast %55 : vector<4x1xf32> to vector<4x1xf32>
    %69 = vector.broadcast %68 : vector<4x1xf32> to vector<4x128xf32>
    %70 = arith.select %67, %69, %65 : vector<4x128xi1>, vector<4x128xf32>
    %cst_20 = arith.constant 9.99999993E-9 : f32
    %71 = vector.broadcast %cst_20 : f32 to vector<4x1xf32>
    %72 = arith.addf %53, %71 : vector<4x1xf32>
    %cst_21 = arith.constant 1.000000e-01 : f32
    %73 = vector.broadcast %cst_21 : f32 to vector<4x1xf32>
    %74 = arith.mulf %73, %72 : vector<4x1xf32>
    %75 = vector.broadcast %74 : vector<4x1xf32> to vector<4x128xf32>
    %76 = arith.cmpf olt, %70, %75 : vector<4x128xf32>
    %77 = arith.extui %76 : vector<4x128xi1> to vector<4x128xi32>
    %78 = arith.sitofp %77 : vector<4x128xi32> to vector<4x128xf32>
    %c127_i32_22 = arith.constant 127 : i32
    %79 = tpu.dynamic_rotate %78 by %c127_i32_22 dim 1 : vector<4x128xf32>, i32 -> vector<4x128xf32>
    %80 = arith.mulf %15, %79 : vector<4x128xf32>
    %81 = arith.mulf %80, %80 : vector<4x128xf32>
    %cst_23 = arith.constant 3.93700786E-4 : f32
    %82 = vector.broadcast %cst_23 : f32 to vector<4x128xf32>
    %83 = arith.mulf %82, %81 : vector<4x128xf32>
    %84 = arith.addf %27, %83 : vector<4x128xf32>
    %85 = arith.subf %15, %80 : vector<4x128xf32>
    %cst_24 = arith.constant 1.500000e-01 : f32
    %86 = vector.broadcast %cst_24 : f32 to vector<4x128xf32>
    %87 = arith.maximumf %22, %86 : vector<4x128xf32>
    %88 = arith.subf %85, %87 : vector<4x128xf32>
    %cst_25 = arith.constant 0.000000e+00 : f32
    %89 = vector.broadcast %cst_25 : f32 to vector<4x128xf32>
    %90 = arith.maximumf %88, %89 : vector<4x128xf32>
    %91 = arith.mulf %90, %90 : vector<4x128xf32>
    %cst_26 = arith.constant 9.842520e-05 : f32
    %92 = vector.broadcast %cst_26 : f32 to vector<4x128xf32>
    %93 = arith.mulf %92, %91 : vector<4x128xf32>
    %94 = arith.addf %84, %93 : vector<4x128xf32>
    %95 = vector.shape_cast %94 : vector<4x128xf32> to vector<1x4x128xf32>
    %cst_27 = arith.constant dense<0.000000e+00> : vector<1xf32>
    %96 = vector.multi_reduction <add>, %95, %cst_27 [1, 2] : vector<1x4x128xf32> to vector<1xf32>
    %97 = vector.shape_cast %96 : vector<1xf32> to vector<1x1x1xf32>
    %98 = vector.extract %97[0, 0, 0] : f32 from vector<1x1x1xf32>
    %99 = vector.broadcast %98 : f32 to vector<1x8x128xf32>
    %c0_28 = arith.constant 0 : index
    %c0_29 = arith.constant 0 : index
    %c0_30 = arith.constant 0 : index
    %100 = vector.load %arg4[%c0_28, %c0_29, %c0_30] : memref<1x8x128xf32, #tpu.memory_space<vmem>>, vector<1x8x128xf32>
    tpu.vector_store %arg4[%c0_28, %c0_29, %c0_30], %99 {strides = array<i32>} : memref<1x8x128xf32, #tpu.memory_space<vmem>>, vector<1x8x128xf32>,
    return
  }
  func.func @transform_0(%arg0: i32) -> (i32, i32) {
    %c0_i32 = arith.constant 0 : i32
    %c0_i32_0 = arith.constant 0 : i32
    return %arg0, %c0_i32 : i32, i32
  }
  func.func @transform_1(%arg0: i32) -> (i32, i32) {
    %c0_i32 = arith.constant 0 : i32
    %c0_i32_0 = arith.constant 0 : i32
    return %arg0, %c0_i32 : i32, i32
  }
  func.func @transform_2(%arg0: i32) -> (i32, i32) {
    %c0_i32 = arith.constant 0 : i32
    %c0_i32_0 = arith.constant 0 : i32
    %c0_i32_1 = arith.constant 0 : i32
    return %c0_i32, %c0_i32_0 : i32, i32
  }
  func.func @transform_3(%arg0: i32) -> (i32, i32, i32) {
    %c0_i32 = arith.constant 0 : i32
    %c0_i32_0 = arith.constant 0 : i32
    %c0_i32_1 = arith.constant 0 : i32
    return %arg0, %c0_i32, %c0_i32_0 : i32, i32, i32
  }
}

</mosaic_0001>

<llo_original>
// kernel: adaptive_gradient_constraint_loss.1
$region0: #{adaptive_gradient_constraint_loss.1}
  #allocation0 [shape = 'u32[]', space=smem, size = 0x4, offset = 0x4, fixed_abs, tag = 'smem constant byte address 0x4 - core index']
  #allocation1 [shape = 'u32[144,128]{1,0:T(1,128)}', space=vmem, size = 0x12000, scoped, tag = 'internal scratch']
  %s0 = inlined_call_operand.vmem [shape: f32[4,128], index: 0, kind: input, shape index: {}]
  %s1 = inlined_call_operand.vmem [shape: f32[4,128], index: 1, kind: input, shape index: {}]
  %s2 = inlined_call_operand.vmem [shape: f32[128,128], index: 2, kind: input, shape index: {}]
  %s3 = inlined_call_operand.vmem [shape: f32[1,8,128], index: 3, kind: output, shape index: {}]
  %s4 = sld [smem:[#allocation0]]
  $region22: #{adaptive_gradient_constraint_loss.1} parent=0
    _
  %s6 = ssub.s32 1, %s4
  %s7 = scalar_select 0, %s6, %s4
  // Predicated region
  $region2: #{adaptive_gradient_constraint_loss.1} parent=0 // pred_check
    _
  $region3: #{adaptive_gradient_constraint_loss.1} parent=0 // pred_check_branch
    %9 = sbr.rel (0) target = $region5
  $region4: #{adaptive_gradient_constraint_loss.1} parent=0 // pred_region
    _
  $region5: #{adaptive_gradient_constraint_loss.1} parent=0 // pred_fallthru
    _
  // Predicated region
  $region6: #{adaptive_gradient_constraint_loss.1} parent=0 // pred_check
    _
  $region7: #{adaptive_gradient_constraint_loss.1} parent=0 // pred_check_branch
    %11 = sbr.rel (0) target = $region9
  $region8: #{adaptive_gradient_constraint_loss.1} parent=0 // pred_region
    _
  $region9: #{adaptive_gradient_constraint_loss.1} parent=0 // pred_fallthru
    _
  // Predicated region
  $region10: #{adaptive_gradient_constraint_loss.1} parent=0 // pred_check
    _
  $region11: #{adaptive_gradient_constraint_loss.1} parent=0 // pred_check_branch
    %13 = sbr.rel (0) target = $region13
  $region12: #{adaptive_gradient_constraint_loss.1} parent=0 // pred_region
    _
  $region13: #{adaptive_gradient_constraint_loss.1} parent=0 // pred_fallthru
    _
  %v14 = vld [vmem:[%s0] sm:$0xf]
  %v15 = vld [vmem:[%s1] sm:$0xf]
  %v16 = vsub.f32 %v14, %v15
  %v17 = vmul.f32 %v16, %v16
  %v18 = vmul.f32 %v17, 0.001953125
  %v19 = vlaneseq
  %v20 = vand.u32 %v19, 127
  %vm21 = vcmp.lt.s32.totalorder %v20, 127
  %22 = vrot.lane.b32.xlu0 %v14, 127
  %v23 = vpop.permute.xlu0 %22
  %v24 = vsub.f32 %v23, %v14
  %v25 = vand.u32 2147483647, %v24
  %v26 = vsel %vm21, 1, 0
  %vm27 = vcmp.eq.s32.totalorder %v26, 1
  %v28 = vsel %vm27, %v25, 0.0
  %29 = vrot.lane.b32.xlu0 %v15, 127
  %v30 = vpop.permute.xlu0 %29
  %v31 = vsub.f32 %v30, %v15
  %v32 = vand.u32 2147483647, %v31
  %v33 = vsel %vm27, %v32, 0.0
  %v34 = vsub.f32 %v28, %v33
  %v35 = vmul.f32 %v34, %v34
  %v36 = vmul.f32 %v35, 0.0005905512
  %v37 = vadd.f32 %v18, %v36
  %vm38 = vcmask 1043456
  %v39 = vsel %vm38, %v15, 0.0
  %40 = vadd.xlane.f32.xlu0 %v39
  %v41 = vpop.xlane.xlu0 %40
  %v42 = vrcp.pop 128.0
  %v43 = vmul.f32 %v41, %v42
  %v44 = vsub.f32 %v15, %v43
  %v45 = vld [vmem:[%s2] sm:$0xff]
  %v46 = vld [vmem:[%s2 + $0x8] sm:$0xff]
  %v47 = vld [vmem:[%s2 + $0x10] sm:$0xff]
  %v48 = vld [vmem:[%s2 + $0x18] sm:$0xff]
  %v49 = vld [vmem:[%s2 + $0x20] sm:$0xff]
  %v50 = vld [vmem:[%s2 + $0x28] sm:$0xff]
  %v51 = vld [vmem:[%s2 + $0x30] sm:$0xff]
  %v52 = vld [vmem:[%s2 + $0x38] sm:$0xff]
  %v53 = vld [vmem:[%s2 + $0x40] sm:$0xff]
  %v54 = vld [vmem:[%s2 + $0x48] sm:$0xff]
  %v55 = vld [vmem:[%s2 + $0x50] sm:$0xff]
  %v56 = vld [vmem:[%s2 + $0x58] sm:$0xff]
  %v57 = vld [vmem:[%s2 + $0x60] sm:$0xff]
  %v58 = vld [vmem:[%s2 + $0x68] sm:$0xff]
  %v59 = vld [vmem:[%s2 + $0x70] sm:$0xff]
  %v60 = vld [vmem:[%s2 + $0x78] sm:$0xff]
  %61 = vmatprep.subr.mxu0 0.0
  %v62 = vand.u32 %v60, 4294901760
  %63 = vmatpush1.msra.mxu0 %v62
  %64 = vmatprep.subr.mxu0 0.0
  %v65 = vand.u32 %v59, 4294901760
  %66 = vmatpush1.msra.mxu0 %v65
  %67 = vmatprep.subr.mxu0 0.0
  %v68 = vand.u32 %v58, 4294901760
  %69 = vmatpush1.msra.mxu0 %v68
  %70 = vmatprep.subr.mxu0 0.0
  %v71 = vand.u32 %v57, 4294901760
  %72 = vmatpush1.msra.mxu0 %v71
  %73 = vmatprep.subr.mxu0 0.0
  %v74 = vand.u32 %v56, 4294901760
  %75 = vmatpush1.msra.mxu0 %v74
  %76 = vmatprep.subr.mxu0 0.0
  %v77 = vand.u32 %v55, 4294901760
  %78 = vmatpush1.msra.mxu0 %v77
  %79 = vmatprep.subr.mxu0 0.0
  %v80 = vand.u32 %v54, 4294901760
  %81 = vmatpush1.msra.mxu0 %v80
  %82 = vmatprep.subr.mxu0 0.0
  %v83 = vand.u32 %v53, 4294901760
  %84 = vmatpush1.msra.mxu0 %v83
  %85 = vmatprep.subr.mxu0 0.0
  %v86 = vand.u32 %v52, 4294901760
  %87 = vmatpush1.msra.mxu0 %v86
  %88 = vmatprep.subr.mxu0 0.0
  %v89 = vand.u32 %v51, 4294901760
  %90 = vmatpush1.msra.mxu0 %v89
  %91 = vmatprep.subr.mxu0 0.0
  %v92 = vand.u32 %v50, 4294901760
  %93 = vmatpush1.msra.mxu0 %v92
  %94 = vmatprep.subr.mxu0 0.0
  %v95 = vand.u32 %v49, 4294901760
  %96 = vmatpush1.msra.mxu0 %v95
  %97 = vmatprep.subr.mxu0 0.0
  %v98 = vand.u32 %v48, 4294901760
  %99 = vmatpush1.msra.mxu0 %v98
  %100 = vmatprep.subr.mxu0 0.0
  %v101 = vand.u32 %v47, 4294901760
  %102 = vmatpush1.msra.mxu0 %v101
  %103 = vmatprep.subr.mxu0 0.0
  %v104 = vand.u32 %v46, 4294901760
  %105 = vmatpush1.msra.mxu0 %v104
  %106 = vmatprep.subr.mxu0 0.0
  %v107 = vand.u32 %v45, 4294901760
  %108 = vmatpush1.msra.mxu0 %v107
  %109 = vmatprep.subr.mxu0 0.0
  %110 = vmatpush2.msra.mxu0 0.0
  %111 = vmatprep.subr.mxu0 0.0
  %112 = vmatpush2.msra.mxu0 0.0
  %113 = vmatprep.subr.mxu0 0.0
  %114 = vmatpush2.msra.mxu0 0.0
  %115 = vmatprep.subr.mxu0 0.0
  %116 = vmatpush2.msra.mxu0 0.0
  %117 = vmatprep.subr.mxu0 0.0
  %118 = vmatpush2.msra.mxu0 0.0
  %119 = vmatprep.subr.mxu0 0.0
  %120 = vmatpush2.msra.mxu0 0.0
  %121 = vmatprep.subr.mxu0 0.0
  %122 = vmatpush2.msra.mxu0 0.0
  %123 = vmatprep.subr.mxu0 0.0
  %124 = vmatpush2.msra.mxu0 0.0
  %125 = vmatprep.subr.mxu0 0.0
  %126 = vmatpush2.msra.mxu0 0.0
  %127 = vmatprep.subr.mxu0 0.0
  %128 = vmatpush2.msra.mxu0 0.0
  %129 = vmatprep.subr.mxu0 0.0
  %130 = vmatpush2.msra.mxu0 0.0
  %131 = vmatprep.subr.mxu0 0.0
  %132 = vmatpush2.msra.mxu0 0.0
  %133 = vmatprep.subr.mxu0 0.0
  %134 = vmatpush2.msra.mxu0 0.0
  %135 = vmatprep.subr.mxu0 0.0
  %136 = vmatpush2.msra.mxu0 0.0
  %137 = vmatprep.subr.mxu0 0.0
  %138 = vmatpush2.msra.mxu0 0.0
  %139 = vmatprep.subr.mxu0 0.0
  %140 = vmatpush2.msra.mxu0 0.0
  %141 = vmatprep.mubr.f32.mxu0 0.0
  %v142 = vand.u32 %v44, 4294901760
  %v143 = vsub.f32 %v44, %v142
  %v144 = vand.u32 %v143, 4294901760
  %v145 = vsub.f32 %v143, %v144
  %v146 = vand.u32 %v145, 4294901760
  %147 = vmatmul.mubr.f32.gmra.mxu0 %v146
  %v148 = vpop.f32.mrf.mxu0
  %v149 = vadd.f32 0.0, %v148
  %v150 = vpop.f32.mrf.mxu0
  %151 = vdwg.mxu0
  %152 = vmatprep.subr.mxu0 0.0
  %v153 = vand.u32 %v60, 4294901760
  %v154 = vsub.f32 %v60, %v153
  %v155 = vand.u32 %v154, 4294901760
  %v156 = vsub.f32 %v154, %v155
  %v157 = vand.u32 %v156, 4294901760
  %158 = vmatpush1.msra.mxu0 %v157
  %159 = vmatprep.subr.mxu0 0.0
  %v160 = vand.u32 %v59, 4294901760
  %v161 = vsub.f32 %v59, %v160
  %v162 = vand.u32 %v161, 4294901760
  %v163 = vsub.f32 %v161, %v162
  %v164 = vand.u32 %v163, 4294901760
  %165 = vmatpush1.msra.mxu0 %v164
  %166 = vmatprep.subr.mxu0 0.0
  %v167 = vand.u32 %v58, 4294901760
  %v168 = vsub.f32 %v58, %v167
  %v169 = vand.u32 %v168, 4294901760
  %v170 = vsub.f32 %v168, %v169
  %v171 = vand.u32 %v170, 4294901760
  %172 = vmatpush1.msra.mxu0 %v171
  %173 = vmatprep.subr.mxu0 0.0
  %v174 = vand.u32 %v57, 4294901760
  %v175 = vsub.f32 %v57, %v174
  %v176 = vand.u32 %v175, 4294901760
  %v177 = vsub.f32 %v175, %v176
  %v178 = vand.u32 %v177, 4294901760
  %179 = vmatpush1.msra.mxu0 %v178
  %180 = vmatprep.subr.mxu0 0.0
  %v181 = vand.u32 %v56, 4294901760
  %v182 = vsub.f32 %v56, %v181
  %v183 = vand.u32 %v182, 4294901760
  %v184 = vsub.f32 %v182, %v183
  %v185 = vand.u32 %v184, 4294901760
  %186 = vmatpush1.msra.mxu0 %v185
  %187 = vmatprep.subr.mxu0 0.0
  %v188 = vand.u32 %v55, 4294901760
  %v189 = vsub.f32 %v55, %v188
  %v190 = vand.u32 %v189, 4294901760
  %v191 = vsub.f32 %v189, %v190
  %v192 = vand.u32 %v191, 4294901760
  %193 = vmatpush1.msra.mxu0 %v192
  %194 = vmatprep.subr.mxu0 0.0
  %v195 = vand.u32 %v54, 4294901760
  %v196 = vsub.f32 %v54, %v195
  %v197 = vand.u32 %v196, 4294901760
  %v198 = vsub.f32 %v196, %v197
  %v199 = vand.u32 %v198, 4294901760
  %200 = vmatpush1.msra.mxu0 %v199
  %201 = vmatprep.subr.mxu0 0.0
  %v202 = vand.u32 %v53, 4294901760
  %v203 = vsub.f32 %v53, %v202
  %v204 = vand.u32 %v203, 4294901760
  %v205 = vsub.f32 %v203, %v204
  %v206 = vand.u32 %v205, 4294901760
  %207 = vmatpush1.msra.mxu0 %v206
  %208 = vmatprep.subr.mxu0 0.0
  %v209 = vand.u32 %v52, 4294901760
  %v210 = vsub.f32 %v52, %v209
  %v211 = vand.u32 %v210, 4294901760
  %v212 = vsub.f32 %v210, %v211
  %v213 = vand.u32 %v212, 4294901760
  %214 = vmatpush1.msra.mxu0 %v213
  %215 = vmatprep.subr.mxu0 0.0
  %v216 = vand.u32 %v51, 4294901760
  %v217 = vsub.f32 %v51, %v216
  %v218 = vand.u32 %v217, 4294901760
  %v219 = vsub.f32 %v217, %v218
  %v220 = vand.u32 %v219, 4294901760
  %221 = vmatpush1.msra.mxu0 %v220
  %222 = vmatprep.subr.mxu0 0.0
  %v223 = vand.u32 %v50, 4294901760
  %v224 = vsub.f32 %v50, %v223
  %v225 = vand.u32 %v224, 4294901760
  %v226 = vsub.f32 %v224, %v225
  %v227 = vand.u32 %v226, 4294901760
  %228 = vmatpush1.msra.mxu0 %v227
  %229 = vmatprep.subr.mxu0 0.0
  %v230 = vand.u32 %v49, 4294901760
  %v231 = vsub.f32 %v49, %v230
  %v232 = vand.u32 %v231, 4294901760
  %v233 = vsub.f32 %v231, %v232
  %v234 = vand.u32 %v233, 4294901760
  %235 = vmatpush1.msra.mxu0 %v234
  %236 = vmatprep.subr.mxu0 0.0
  %v237 = vand.u32 %v48, 4294901760
  %v238 = vsub.f32 %v48, %v237
  %v239 = vand.u32 %v238, 4294901760
  %v240 = vsub.f32 %v238, %v239
  %v241 = vand.u32 %v240, 4294901760
  %242 = vmatpush1.msra.mxu0 %v241
  %243 = vmatprep.subr.mxu0 0.0
  %v244 = vand.u32 %v47, 4294901760
  %v245 = vsub.f32 %v47, %v244
  %v246 = vand.u32 %v245, 4294901760
  %v247 = vsub.f32 %v245, %v246
  %v248 = vand.u32 %v247, 4294901760
  %249 = vmatpush1.msra.mxu0 %v248
  %250 = vmatprep.subr.mxu0 0.0
  %v251 = vand.u32 %v46, 4294901760
  %v252 = vsub.f32 %v46, %v251
  %v253 = vand.u32 %v252, 4294901760
  %v254 = vsub.f32 %v252, %v253
  %v255 = vand.u32 %v254, 4294901760
  %256 = vmatpush1.msra.mxu0 %v255
  %257 = vmatprep.subr.mxu0 0.0
  %v258 = vand.u32 %v45, 4294901760
  %v259 = vsub.f32 %v45, %v258
  %v260 = vand.u32 %v259, 4294901760
  %v261 = vsub.f32 %v259, %v260
  %v262 = vand.u32 %v261, 4294901760
  %263 = vmatpush1.msra.mxu0 %v262
  %264 = vmatprep.subr.mxu0 0.0
  %265 = vmatpush2.msra.mxu0 0.0
  %266 = vmatprep.subr.mxu0 0.0
  %267 = vmatpush2.msra.mxu0 0.0
  %268 = vmatprep.subr.mxu0 0.0
  %269 = vmatpush2.msra.mxu0 0.0
  %270 = vmatprep.subr.mxu0 0.0
  %271 = vmatpush2.msra.mxu0 0.0
  %272 = vmatprep.subr.mxu0 0.0
  %273 = vmatpush2.msra.mxu0 0.0
  %274 = vmatprep.subr.mxu0 0.0
  %275 = vmatpush2.msra.mxu0 0.0
  %276 = vmatprep.subr.mxu0 0.0
  %277 = vmatpush2.msra.mxu0 0.0
  %278 = vmatprep.subr.mxu0 0.0
  %279 = vmatpush2.msra.mxu0 0.0
  %280 = vmatprep.subr.mxu0 0.0
  %281 = vmatpush2.msra.mxu0 0.0
  %282 = vmatprep.subr.mxu0 0.0
  %283 = vmatpush2.msra.mxu0 0.0
  %284 = vmatprep.subr.mxu0 0.0
  %285 = vmatpush2.msra.mxu0 0.0
  %286 = vmatprep.subr.mxu0 0.0
  %287 = vmatpush2.msra.mxu0 0.0
  %288 = vmatprep.subr.mxu0 0.0
  %289 = vmatpush2.msra.mxu0 0.0
  %290 = vmatprep.subr.mxu0 0.0
  %291 = vmatpush2.msra.mxu0 0.0
  %292 = vmatprep.subr.mxu0 0.0
  %293 = vmatpush2.msra.mxu0 0.0
  %294 = vmatprep.subr.mxu0 0.0
  %295 = vmatpush2.msra.mxu0 0.0
  %296 = vmatprep.mubr.f32.mxu0 0.0
  %v297 = vand.u32 %v44, 4294901760
  %298 = vmatmul.mubr.f32.gmra.mxu0 %v297
  %v299 = vpop.f32.mrf.mxu0
  %v300 = vadd.f32 %v149, %v299
  %v301 = vpop.f32.mrf.mxu0
  %302 = vdwg.mxu0
  %303 = vmatprep.subr.mxu0 0.0
  %v304 = vand.u32 %v60, 4294901760
  %v305 = vsub.f32 %v60, %v304
  %306 = vmatpush1.msra.mxu0 %v305
  %307 = vmatprep.subr.mxu0 0.0
  %v308 = vand.u32 %v59, 4294901760
  %v309 = vsub.f32 %v59, %v308
  %310 = vmatpush1.msra.mxu0 %v309
  %311 = vmatprep.subr.mxu0 0.0
  %v312 = vand.u32 %v58, 4294901760
  %v313 = vsub.f32 %v58, %v312
  %314 = vmatpush1.msra.mxu0 %v313
  %315 = vmatprep.subr.mxu0 0.0
  %v316 = vand.u32 %v57, 4294901760
  %v317 = vsub.f32 %v57, %v316
  %318 = vmatpush1.msra.mxu0 %v317
  %319 = vmatprep.subr.mxu0 0.0
  %v320 = vand.u32 %v56, 4294901760
  %v321 = vsub.f32 %v56, %v320
  %322 = vmatpush1.msra.mxu0 %v321
  %323 = vmatprep.subr.mxu0 0.0
  %v324 = vand.u32 %v55, 4294901760
  %v325 = vsub.f32 %v55, %v324
  %326 = vmatpush1.msra.mxu0 %v325
  %327 = vmatprep.subr.mxu0 0.0
  %v328 = vand.u32 %v54, 4294901760
  %v329 = vsub.f32 %v54, %v328
  %330 = vmatpush1.msra.mxu0 %v329
  %331 = vmatprep.subr.mxu0 0.0
  %v332 = vand.u32 %v53, 4294901760
  %v333 = vsub.f32 %v53, %v332
  %334 = vmatpush1.msra.mxu0 %v333
  %335 = vmatprep.subr.mxu0 0.0
  %v336 = vand.u32 %v52, 4294901760
  %v337 = vsub.f32 %v52, %v336
  %338 = vmatpush1.msra.mxu0 %v337
  %339 = vmatprep.subr.mxu0 0.0
  %v340 = vand.u32 %v51, 4294901760
  %v341 = vsub.f32 %v51, %v340
  %342 = vmatpush1.msra.mxu0 %v341
  %343 = vmatprep.subr.mxu0 0.0
  %v344 = vand.u32 %v50, 4294901760
  %v345 = vsub.f32 %v50, %v344
  %346 = vmatpush1.msra.mxu0 %v345
  %347 = vmatprep.subr.mxu0 0.0
  %v348 = vand.u32 %v49, 4294901760
  %v349 = vsub.f32 %v49, %v348
  %350 = vmatpush1.msra.mxu0 %v349
  %351 = vmatprep.subr.mxu0 0.0
  %v352 = vand.u32 %v48, 4294901760
  %v353 = vsub.f32 %v48, %v352
  %354 = vmatpush1.msra.mxu0 %v353
  %355 = vmatprep.subr.mxu0 0.0
  %v356 = vand.u32 %v47, 4294901760
  %v357 = vsub.f32 %v47, %v356
  %358 = vmatpush1.msra.mxu0 %v357
  %359 = vmatprep.subr.mxu0 0.0
  %v360 = vand.u32 %v46, 4294901760
  %v361 = vsub.f32 %v46, %v360
  %362 = vmatpush1.msra.mxu0 %v361
  %363 = vmatprep.subr.mxu0 0.0
  %v364 = vand.u32 %v45, 4294901760
  %v365 = vsub.f32 %v45, %v364
  %366 = vmatpush1.msra.mxu0 %v365
  %367 = vmatprep.subr.mxu0 0.0
  %368 = vmatpush2.msra.mxu0 0.0
  %369 = vmatprep.subr.mxu0 0.0
  %370 = vmatpush2.msra.mxu0 0.0
  %371 = vmatprep.subr.mxu0 0.0
  %372 = vmatpush2.msra.mxu0 0.0
  %373 = vmatprep.subr.mxu0 0.0
  %374 = vmatpush2.msra.mxu0 0.0
  %375 = vmatprep.subr.mxu0 0.0
  %376 = vmatpush2.msra.mxu0 0.0
  %377 = vmatprep.subr.mxu0 0.0
  %378 = vmatpush2.msra.mxu0 0.0
  %379 = vmatprep.subr.mxu0 0.0
  %380 = vmatpush2.msra.mxu0 0.0
  %381 = vmatprep.subr.mxu0 0.0
  %382 = vmatpush2.msra.mxu0 0.0
  %383 = vmatprep.subr.mxu0 0.0
  %384 = vmatpush2.msra.mxu0 0.0
  %385 = vmatprep.subr.mxu0 0.0
  %386 = vmatpush2.msra.mxu0 0.0
  %387 = vmatprep.subr.mxu0 0.0
  %388 = vmatpush2.msra.mxu0 0.0
  %389 = vmatprep.subr.mxu0 0.0
  %390 = vmatpush2.msra.mxu0 0.0
  %391 = vmatprep.subr.mxu0 0.0
  %392 = vmatpush2.msra.mxu0 0.0
  %393 = vmatprep.subr.mxu0 0.0
  %394 = vmatpush2.msra.mxu0 0.0
  %395 = vmatprep.subr.mxu0 0.0
  %396 = vmatpush2.msra.mxu0 0.0
  %397 = vmatprep.subr.mxu0 0.0
  %398 = vmatpush2.msra.mxu0 0.0
  %399 = vmatprep.mubr.f32.mxu0 0.0
  %v400 = vand.u32 %v44, 4294901760
  %v401 = vsub.f32 %v44, %v400
  %402 = vmatmul.mubr.f32.gmra.mxu0 %v401
  %v403 = vpop.f32.mrf.mxu0
  %v404 = vadd.f32 %v300, %v403
  %v405 = vpop.f32.mrf.mxu0
  %406 = vdwg.mxu0
  %407 = vmatprep.subr.mxu0 0.0
  %v408 = vand.u32 %v60, 4294901760
  %409 = vmatpush1.msra.mxu0 %v408
  %410 = vmatprep.subr.mxu0 0.0
  %v411 = vand.u32 %v59, 4294901760
  %412 = vmatpush1.msra.mxu0 %v411
  %413 = vmatprep.subr.mxu0 0.0
  %v414 = vand.u32 %v58, 4294901760
  %415 = vmatpush1.msra.mxu0 %v414
  %416 = vmatprep.subr.mxu0 0.0
  %v417 = vand.u32 %v57, 4294901760
  %418 = vmatpush1.msra.mxu0 %v417
  %419 = vmatprep.subr.mxu0 0.0
  %v420 = vand.u32 %v56, 4294901760
  %421 = vmatpush1.msra.mxu0 %v420
  %422 = vmatprep.subr.mxu0 0.0
  %v423 = vand.u32 %v55, 4294901760
  %424 = vmatpush1.msra.mxu0 %v423
  %425 = vmatprep.subr.mxu0 0.0
  %v426 = vand.u32 %v54, 4294901760
  %427 = vmatpush1.msra.mxu0 %v426
  %428 = vmatprep.subr.mxu0 0.0
  %v429 = vand.u32 %v53, 4294901760
  %430 = vmatpush1.msra.mxu0 %v429
  %431 = vmatprep.subr.mxu0 0.0
  %v432 = vand.u32 %v52, 4294901760
  %433 = vmatpush1.msra.mxu0 %v432
  %434 = vmatprep.subr.mxu0 0.0
  %v435 = vand.u32 %v51, 4294901760
  %436 = vmatpush1.msra.mxu0 %v435
  %437 = vmatprep.subr.mxu0 0.0
  %v438 = vand.u32 %v50, 4294901760
  %439 = vmatpush1.msra.mxu0 %v438
  %440 = vmatprep.subr.mxu0 0.0
  %v441 = vand.u32 %v49, 4294901760
  %442 = vmatpush1.msra.mxu0 %v441
  %443 = vmatprep.subr.mxu0 0.0
  %v444 = vand.u32 %v48, 4294901760
  %445 = vmatpush1.msra.mxu0 %v444
  %446 = vmatprep.subr.mxu0 0.0
  %v447 = vand.u32 %v47, 4294901760
  %448 = vmatpush1.msra.mxu0 %v447
  %449 = vmatprep.subr.mxu0 0.0
  %v450 = vand.u32 %v46, 4294901760
  %451 = vmatpush1.msra.mxu0 %v450
  %452 = vmatprep.subr.mxu0 0.0
  %v453 = vand.u32 %v45, 4294901760
  %454 = vmatpush1.msra.mxu0 %v453
  %455 = vmatprep.subr.mxu0 0.0
  %456 = vmatpush2.msra.mxu0 0.0
  %457 = vmatprep.subr.mxu0 0.0
  %458 = vmatpush2.msra.mxu0 0.0
  %459 = vmatprep.subr.mxu0 0.0
  %460 = vmatpush2.msra.mxu0 0.0
  %461 = vmatprep.subr.mxu0 0.0
  %462 = vmatpush2.msra.mxu0 0.0
  %463 = vmatprep.subr.mxu0 0.0
  %464 = vmatpush2.msra.mxu0 0.0
  %465 = vmatprep.subr.mxu0 0.0
  %466 = vmatpush2.msra.mxu0 0.0
  %467 = vmatprep.subr.mxu0 0.0
  %468 = vmatpush2.msra.mxu0 0.0
  %469 = vmatprep.subr.mxu0 0.0
  %470 = vmatpush2.msra.mxu0 0.0
  %471 = vmatprep.subr.mxu0 0.0
  %472 = vmatpush2.msra.mxu0 0.0
  %473 = vmatprep.subr.mxu0 0.0
  %474 = vmatpush2.msra.mxu0 0.0
  %475 = vmatprep.subr.mxu0 0.0
  %476 = vmatpush2.msra.mxu0 0.0
  %477 = vmatprep.subr.mxu0 0.0
  %478 = vmatpush2.msra.mxu0 0.0
  %479 = vmatprep.subr.mxu0 0.0
  %480 = vmatpush2.msra.mxu0 0.0
  %481 = vmatprep.subr.mxu0 0.0
  %482 = vmatpush2.msra.mxu0 0.0
  %483 = vmatprep.subr.mxu0 0.0
  %484 = vmatpush2.msra.mxu0 0.0
  %485 = vmatprep.subr.mxu0 0.0
  %486 = vmatpush2.msra.mxu0 0.0
  %487 = vmatprep.mubr.f32.mxu0 0.0
  %v488 = vand.u32 %v44, 4294901760
  %v489 = vsub.f32 %v44, %v488
  %v490 = vand.u32 %v489, 4294901760
  %491 = vmatmul.mubr.f32.gmra.mxu0 %v490
  %v492 = vpop.f32.mrf.mxu0
  %v493 = vadd.f32 %v404, %v492
  %v494 = vpop.f32.mrf.mxu0
  %495 = vdwg.mxu0
  %496 = vmatprep.subr.mxu0 0.0
  %v497 = vand.u32 %v60, 4294901760
  %v498 = vsub.f32 %v60, %v497
  %v499 = vand.u32 %v498, 4294901760
  %500 = vmatpush1.msra.mxu0 %v499
  %501 = vmatprep.subr.mxu0 0.0
  %v502 = vand.u32 %v59, 4294901760
  %v503 = vsub.f32 %v59, %v502
  %v504 = vand.u32 %v503, 4294901760
  %505 = vmatpush1.msra.mxu0 %v504
  %506 = vmatprep.subr.mxu0 0.0
  %v507 = vand.u32 %v58, 4294901760
  %v508 = vsub.f32 %v58, %v507
  %v509 = vand.u32 %v508, 4294901760
  %510 = vmatpush1.msra.mxu0 %v509
  %511 = vmatprep.subr.mxu0 0.0
  %v512 = vand.u32 %v57, 4294901760
  %v513 = vsub.f32 %v57, %v512
  %v514 = vand.u32 %v513, 4294901760
  %515 = vmatpush1.msra.mxu0 %v514
  %516 = vmatprep.subr.mxu0 0.0
  %v517 = vand.u32 %v56, 4294901760
  %v518 = vsub.f32 %v56, %v517
  %v519 = vand.u32 %v518, 4294901760
  %520 = vmatpush1.msra.mxu0 %v519
  %521 = vmatprep.subr.mxu0 0.0
  %v522 = vand.u32 %v55, 4294901760
  %v523 = vsub.f32 %v55, %v522
  %v524 = vand.u32 %v523, 4294901760
  %525 = vmatpush1.msra.mxu0 %v524
  %526 = vmatprep.subr.mxu0 0.0
  %v527 = vand.u32 %v54, 4294901760
  %v528 = vsub.f32 %v54, %v527
  %v529 = vand.u32 %v528, 4294901760
  %530 = vmatpush1.msra.mxu0 %v529
  %531 = vmatprep.subr.mxu0 0.0
  %v532 = vand.u32 %v53, 4294901760
  %v533 = vsub.f32 %v53, %v532
  %v534 = vand.u32 %v533, 4294901760
  %535 = vmatpush1.msra.mxu0 %v534
  %536 = vmatprep.subr.mxu0 0.0
  %v537 = vand.u32 %v52, 4294901760
  %v538 = vsub.f32 %v52, %v537
  %v539 = vand.u32 %v538, 4294901760
  %540 = vmatpush1.msra.mxu0 %v539
  %541 = vmatprep.subr.mxu0 0.0
  %v542 = vand.u32 %v51, 4294901760
  %v543 = vsub.f32 %v51, %v542
  %v544 = vand.u32 %v543, 4294901760
  %545 = vmatpush1.msra.mxu0 %v544
  %546 = vmatprep.subr.mxu0 0.0
  %v547 = vand.u32 %v50, 4294901760
  %v548 = vsub.f32 %v50, %v547
  %v549 = vand.u32 %v548, 4294901760
  %550 = vmatpush1.msra.mxu0 %v549
  %551 = vmatprep.subr.mxu0 0.0
  %v552 = vand.u32 %v49, 4294901760
  %v553 = vsub.f32 %v49, %v552
  %v554 = vand.u32 %v553, 4294901760
  %555 = vmatpush1.msra.mxu0 %v554
  %556 = vmatprep.subr.mxu0 0.0
  %v557 = vand.u32 %v48, 4294901760
  %v558 = vsub.f32 %v48, %v557
  %v559 = vand.u32 %v558, 4294901760
  %560 = vmatpush1.msra.mxu0 %v559
  %561 = vmatprep.subr.mxu0 0.0
  %v562 = vand.u32 %v47, 4294901760
  %v563 = vsub.f32 %v47, %v562
  %v564 = vand.u32 %v563, 4294901760
  %565 = vmatpush1.msra.mxu0 %v564
  %566 = vmatprep.subr.mxu0 0.0
  %v567 = vand.u32 %v46, 4294901760
  %v568 = vsub.f32 %v46, %v567
  %v569 = vand.u32 %v568, 4294901760
  %570 = vmatpush1.msra.mxu0 %v569
  %571 = vmatprep.subr.mxu0 0.0
  %v572 = vand.u32 %v45, 4294901760
  %v573 = vsub.f32 %v45, %v572
  %v574 = vand.u32 %v573, 4294901760
  %575 = vmatpush1.msra.mxu0 %v574
  %576 = vmatprep.subr.mxu0 0.0
  %577 = vmatpush2.msra.mxu0 0.0
  %578 = vmatprep.subr.mxu0 0.0
  %579 = vmatpush2.msra.mxu0 0.0
  %580 = vmatprep.subr.mxu0 0.0
  %581 = vmatpush2.msra.mxu0 0.0
  %582 = vmatprep.subr.mxu0 0.0
  %583 = vmatpush2.msra.mxu0 0.0
  %584 = vmatprep.subr.mxu0 0.0
  %585 = vmatpush2.msra.mxu0 0.0
  %586 = vmatprep.subr.mxu0 0.0
  %587 = vmatpush2.msra.mxu0 0.0
  %588 = vmatprep.subr.mxu0 0.0
  %589 = vmatpush2.msra.mxu0 0.0
  %590 = vmatprep.subr.mxu0 0.0
  %591 = vmatpush2.msra.mxu0 0.0
  %592 = vmatprep.subr.mxu0 0.0
  %593 = vmatpush2.msra.mxu0 0.0
  %594 = vmatprep.subr.mxu0 0.0
  %595 = vmatpush2.msra.mxu0 0.0
  %596 = vmatprep.subr.mxu0 0.0
  %597 = vmatpush2.msra.mxu0 0.0
  %598 = vmatprep.subr.mxu0 0.0
  %599 = vmatpush2.msra.mxu0 0.0
  %600 = vmatprep.subr.mxu0 0.0
  %601 = vmatpush2.msra.mxu0 0.0
  %602 = vmatprep.subr.mxu0 0.0
  %603 = vmatpush2.msra.mxu0 0.0
  %604 = vmatprep.subr.mxu0 0.0
  %605 = vmatpush2.msra.mxu0 0.0
  %606 = vmatprep.subr.mxu0 0.0
  %607 = vmatpush2.msra.mxu0 0.0
  %608 = vmatprep.mubr.f32.mxu0 0.0
  %v609 = vand.u32 %v44, 4294901760
  %610 = vmatmul.mubr.f32.gmra.mxu0 %v609
  %v611 = vpop.f32.mrf.mxu0
  %v612 = vadd.f32 %v493, %v611
  %v613 = vpop.f32.mrf.mxu0
  %614 = vdwg.mxu0
  %615 = vmatprep.subr.mxu0 0.0
  %v616 = vand.u32 %v60, 4294901760
  %617 = vmatpush1.msra.mxu0 %v616
  %618 = vmatprep.subr.mxu0 0.0
  %v619 = vand.u32 %v59, 4294901760
  %620 = vmatpush1.msra.mxu0 %v619
  %621 = vmatprep.subr.mxu0 0.0
  %v622 = vand.u32 %v58, 4294901760
  %623 = vmatpush1.msra.mxu0 %v622
  %624 = vmatprep.subr.mxu0 0.0
  %v625 = vand.u32 %v57, 4294901760
  %626 = vmatpush1.msra.mxu0 %v625
  %627 = vmatprep.subr.mxu0 0.0
  %v628 = vand.u32 %v56, 4294901760
  %629 = vmatpush1.msra.mxu0 %v628
  %630 = vmatprep.subr.mxu0 0.0
  %v631 = vand.u32 %v55, 4294901760
  %632 = vmatpush1.msra.mxu0 %v631
  %633 = vmatprep.subr.mxu0 0.0
  %v634 = vand.u32 %v54, 4294901760
  %635 = vmatpush1.msra.mxu0 %v634
  %636 = vmatprep.subr.mxu0 0.0
  %v637 = vand.u32 %v53, 4294901760
  %638 = vmatpush1.msra.mxu0 %v637
  %639 = vmatprep.subr.mxu0 0.0
  %v640 = vand.u32 %v52, 4294901760
  %641 = vmatpush1.msra.mxu0 %v640
  %642 = vmatprep.subr.mxu0 0.0
  %v643 = vand.u32 %v51, 4294901760
  %644 = vmatpush1.msra.mxu0 %v643
  %645 = vmatprep.subr.mxu0 0.0
  %v646 = vand.u32 %v50, 4294901760
  %647 = vmatpush1.msra.mxu0 %v646
  %648 = vmatprep.subr.mxu0 0.0
  %v649 = vand.u32 %v49, 4294901760
  %650 = vmatpush1.msra.mxu0 %v649
  %651 = vmatprep.subr.mxu0 0.0
  %v652 = vand.u32 %v48, 4294901760
  %653 = vmatpush1.msra.mxu0 %v652
  %654 = vmatprep.subr.mxu0 0.0
  %v655 = vand.u32 %v47, 4294901760
  %656 = vmatpush1.msra.mxu0 %v655
  %657 = vmatprep.subr.mxu0 0.0
  %v658 = vand.u32 %v46, 4294901760
  %659 = vmatpush1.msra.mxu0 %v658
  %660 = vmatprep.subr.mxu0 0.0
  %v661 = vand.u32 %v45, 4294901760
  %662 = vmatpush1.msra.mxu0 %v661
  %663 = vmatprep.subr.mxu0 0.0
  %664 = vmatpush2.msra.mxu0 0.0
  %665 = vmatprep.subr.mxu0 0.0
  %666 = vmatpush2.msra.mxu0 0.0
  %667 = vmatprep.subr.mxu0 0.0
  %668 = vmatpush2.msra.mxu0 0.0
  %669 = vmatprep.subr.mxu0 0.0
  %670 = vmatpush2.msra.mxu0 0.0
  %671 = vmatprep.subr.mxu0 0.0
  %672 = vmatpush2.msra.mxu0 0.0
  %673 = vmatprep.subr.mxu0 0.0
  %674 = vmatpush2.msra.mxu0 0.0
  %675 = vmatprep.subr.mxu0 0.0
  %676 = vmatpush2.msra.mxu0 0.0
  %677 = vmatprep.subr.mxu0 0.0
  %678 = vmatpush2.msra.mxu0 0.0
  %679 = vmatprep.subr.mxu0 0.0
  %680 = vmatpush2.msra.mxu0 0.0
  %681 = vmatprep.subr.mxu0 0.0
  %682 = vmatpush2.msra.mxu0 0.0
  %683 = vmatprep.subr.mxu0 0.0
  %684 = vmatpush2.msra.mxu0 0.0
  %685 = vmatprep.subr.mxu0 0.0
  %686 = vmatpush2.msra.mxu0 0.0
  %687 = vmatprep.subr.mxu0 0.0
  %688 = vmatpush2.msra.mxu0 0.0
  %689 = vmatprep.subr.mxu0 0.0
  %690 = vmatpush2.msra.mxu0 0.0
  %691 = vmatprep.subr.mxu0 0.0
  %692 = vmatpush2.msra.mxu0 0.0
  %693 = vmatprep.subr.mxu0 0.0
  %694 = vmatpush2.msra.mxu0 0.0
  %695 = vmatprep.mubr.f32.mxu0 0.0
  %v696 = vand.u32 %v44, 4294901760
  %697 = vmatmul.mubr.f32.gmra.mxu0 %v696
  %v698 = vpop.f32.mrf.mxu0
  %v699 = vadd.f32 %v612, %v698
  %v700 = vpop.f32.mrf.mxu0
  %701 = vdwg.mxu0
  %v702 = vmul.f32 %v44, %v44
  %703 = vmatprep.subr.mxu0 0.0
  %v704 = vand.u32 %v60, 4294901760
  %705 = vmatpush1.msra.mxu0 %v704
  %706 = vmatprep.subr.mxu0 0.0
  %v707 = vand.u32 %v59, 4294901760
  %708 = vmatpush1.msra.mxu0 %v707
  %709 = vmatprep.subr.mxu0 0.0
  %v710 = vand.u32 %v58, 4294901760
  %711 = vmatpush1.msra.mxu0 %v710
  %712 = vmatprep.subr.mxu0 0.0
  %v713 = vand.u32 %v57, 4294901760
  %714 = vmatpush1.msra.mxu0 %v713
  %715 = vmatprep.subr.mxu0 0.0
  %v716 = vand.u32 %v56, 4294901760
  %717 = vmatpush1.msra.mxu0 %v716
  %718 = vmatprep.subr.mxu0 0.0
  %v719 = vand.u32 %v55, 4294901760
  %720 = vmatpush1.msra.mxu0 %v719
  %721 = vmatprep.subr.mxu0 0.0
  %v722 = vand.u32 %v54, 4294901760
  %723 = vmatpush1.msra.mxu0 %v722
  %724 = vmatprep.subr.mxu0 0.0
  %v725 = vand.u32 %v53, 4294901760
  %726 = vmatpush1.msra.mxu0 %v725
  %727 = vmatprep.subr.mxu0 0.0
  %v728 = vand.u32 %v52, 4294901760
  %729 = vmatpush1.msra.mxu0 %v728
  %730 = vmatprep.subr.mxu0 0.0
  %v731 = vand.u32 %v51, 4294901760
  %732 = vmatpush1.msra.mxu0 %v731
  %733 = vmatprep.subr.mxu0 0.0
  %v734 = vand.u32 %v50, 4294901760
  %735 = vmatpush1.msra.mxu0 %v734
  %736 = vmatprep.subr.mxu0 0.0
  %v737 = vand.u32 %v49, 4294901760
  %738 = vmatpush1.msra.mxu0 %v737
  %739 = vmatprep.subr.mxu0 0.0
  %v740 = vand.u32 %v48, 4294901760
  %741 = vmatpush1.msra.mxu0 %v740
  %742 = vmatprep.subr.mxu0 0.0
  %v743 = vand.u32 %v47, 4294901760
  %744 = vmatpush1.msra.mxu0 %v743
  %745 = vmatprep.subr.mxu0 0.0
  %v746 = vand.u32 %v46, 4294901760
  %747 = vmatpush1.msra.mxu0 %v746
  %748 = vmatprep.subr.mxu0 0.0
  %v749 = vand.u32 %v45, 4294901760
  %750 = vmatpush1.msra.mxu0 %v749
  %751 = vmatprep.subr.mxu0 0.0
  %752 = vmatpush2.msra.mxu0 0.0
  %753 = vmatprep.subr.mxu0 0.0
  %754 = vmatpush2.msra.mxu0 0.0
  %755 = vmatprep.subr.mxu0 0.0
  %756 = vmatpush2.msra.mxu0 0.0
  %757 = vmatprep.subr.mxu0 0.0
  %758 = vmatpush2.msra.mxu0 0.0
  %759 = vmatprep.subr.mxu0 0.0
  %760 = vmatpush2.msra.mxu0 0.0
  %761 = vmatprep.subr.mxu0 0.0
  %762 = vmatpush2.msra.mxu0 0.0
  %763 = vmatprep.subr.mxu0 0.0
  %764 = vmatpush2.msra.mxu0 0.0
  %765 = vmatprep.subr.mxu0 0.0
  %766 = vmatpush2.msra.mxu0 0.0
  %767 = vmatprep.subr.mxu0 0.0
  %768 = vmatpush2.msra.mxu0 0.0
  %769 = vmatprep.subr.mxu0 0.0
  %770 = vmatpush2.msra.mxu0 0.0
  %771 = vmatprep.subr.mxu0 0.0
  %772 = vmatpush2.msra.mxu0 0.0
  %773 = vmatprep.subr.mxu0 0.0
  %774 = vmatpush2.msra.mxu0 0.0
  %775 = vmatprep.subr.mxu0 0.0
  %776 = vmatpush2.msra.mxu0 0.0
  %777 = vmatprep.subr.mxu0 0.0
  %778 = vmatpush2.msra.mxu0 0.0
  %779 = vmatprep.subr.mxu0 0.0
  %780 = vmatpush2.msra.mxu0 0.0
  %781 = vmatprep.subr.mxu0 0.0
  %782 = vmatpush2.msra.mxu0 0.0
  %783 = vmatprep.mubr.f32.mxu0 0.0
  %v784 = vand.u32 %v702, 4294901760
  %v785 = vsub.f32 %v702, %v784
  %v786 = vand.u32 %v785, 4294901760
  %v787 = vsub.f32 %v785, %v786
  %v788 = vand.u32 %v787, 4294901760
  %789 = vmatmul.mubr.f32.gmra.mxu0 %v788
  %v790 = vpop.f32.mrf.mxu0
  %v791 = vadd.f32 0.0, %v790
  %v792 = vpop.f32.mrf.mxu0
  %793 = vdwg.mxu0
  %794 = vmatprep.subr.mxu0 0.0
  %v795 = vand.u32 %v60, 4294901760
  %v796 = vsub.f32 %v60, %v795
  %v797 = vand.u32 %v796, 4294901760
  %v798 = vsub.f32 %v796, %v797
  %v799 = vand.u32 %v798, 4294901760
  %800 = vmatpush1.msra.mxu0 %v799
  %801 = vmatprep.subr.mxu0 0.0
  %v802 = vand.u32 %v59, 4294901760
  %v803 = vsub.f32 %v59, %v802
  %v804 = vand.u32 %v803, 4294901760
  %v805 = vsub.f32 %v803, %v804
  %v806 = vand.u32 %v805, 4294901760
  %807 = vmatpush1.msra.mxu0 %v806
  %808 = vmatprep.subr.mxu0 0.0
  %v809 = vand.u32 %v58, 4294901760
  %v810 = vsub.f32 %v58, %v809
  %v811 = vand.u32 %v810, 4294901760
  %v812 = vsub.f32 %v810, %v811
  %v813 = vand.u32 %v812, 4294901760
  %814 = vmatpush1.msra.mxu0 %v813
  %815 = vmatprep.subr.mxu0 0.0
  %v816 = vand.u32 %v57, 4294901760
  %v817 = vsub.f32 %v57, %v816
  %v818 = vand.u32 %v817, 4294901760
  %v819 = vsub.f32 %v817, %v818
  %v820 = vand.u32 %v819, 4294901760
  %821 = vmatpush1.msra.mxu0 %v820
  %822 = vmatprep.subr.mxu0 0.0
  %v823 = vand.u32 %v56, 4294901760
  %v824 = vsub.f32 %v56, %v823
  %v825 = vand.u32 %v824, 4294901760
  %v826 = vsub.f32 %v824, %v825
  %v827 = vand.u32 %v826, 4294901760
  %828 = vmatpush1.msra.mxu0 %v827
  %829 = vmatprep.subr.mxu0 0.0
  %v830 = vand.u32 %v55, 4294901760
  %v831 = vsub.f32 %v55, %v830
  %v832 = vand.u32 %v831, 4294901760
  %v833 = vsub.f32 %v831, %v832
  %v834 = vand.u32 %v833, 4294901760
  %835 = vmatpush1.msra.mxu0 %v834
  %836 = vmatprep.subr.mxu0 0.0
  %v837 = vand.u32 %v54, 4294901760
  %v838 = vsub.f32 %v54, %v837
  %v839 = vand.u32 %v838, 4294901760
  %v840 = vsub.f32 %v838, %v839
  %v841 = vand.u32 %v840, 4294901760
  %842 = vmatpush1.msra.mxu0 %v841
  %843 = vmatprep.subr.mxu0 0.0
  %v844 = vand.u32 %v53, 4294901760
  %v845 = vsub.f32 %v53, %v844
  %v846 = vand.u32 %v845, 4294901760
  %v847 = vsub.f32 %v845, %v846
  %v848 = vand.u32 %v847, 4294901760
  %849 = vmatpush1.msra.mxu0 %v848
  %850 = vmatprep.subr.mxu0 0.0
  %v851 = vand.u32 %v52, 4294901760
  %v852 = vsub.f32 %v52, %v851
  %v853 = vand.u32 %v852, 4294901760
  %v854 = vsub.f32 %v852, %v853
  %v855 = vand.u32 %v854, 4294901760
  %856 = vmatpush1.msra.mxu0 %v855
  %857 = vmatprep.subr.mxu0 0.0
  %v858 = vand.u32 %v51, 4294901760
  %v859 = vsub.f32 %v51, %v858
  %v860 = vand.u32 %v859, 4294901760
  %v861 = vsub.f32 %v859, %v860
  %v862 = vand.u32 %v861, 4294901760
  %863 = vmatpush1.msra.mxu0 %v862
  %864 = vmatprep.subr.mxu0 0.0
  %v865 = vand.u32 %v50, 4294901760
  %v866 = vsub.f32 %v50, %v865
  %v867 = vand.u32 %v866, 4294901760
  %v868 = vsub.f32 %v866, %v867
  %v869 = vand.u32 %v868, 4294901760
  %870 = vmatpush1.msra.mxu0 %v869
  %871 = vmatprep.subr.mxu0 0.0
  %v872 = vand.u32 %v49, 4294901760
  %v873 = vsub.f32 %v49, %v872
  %v874 = vand.u32 %v873, 4294901760
  %v875 = vsub.f32 %v873, %v874
  %v876 = vand.u32 %v875, 4294901760
  %877 = vmatpush1.msra.mxu0 %v876
  %878 = vmatprep.subr.mxu0 0.0
  %v879 = vand.u32 %v48, 4294901760
  %v880 = vsub.f32 %v48, %v879
  %v881 = vand.u32 %v880, 4294901760
  %v882 = vsub.f32 %v880, %v881
  %v883 = vand.u32 %v882, 4294901760
  %884 = vmatpush1.msra.mxu0 %v883
  %885 = vmatprep.subr.mxu0 0.0
  %v886 = vand.u32 %v47, 4294901760
  %v887 = vsub.f32 %v47, %v886
  %v888 = vand.u32 %v887, 4294901760
  %v889 = vsub.f32 %v887, %v888
  %v890 = vand.u32 %v889, 4294901760
  %891 = vmatpush1.msra.mxu0 %v890
  %892 = vmatprep.subr.mxu0 0.0
  %v893 = vand.u32 %v46, 4294901760
  %v894 = vsub.f32 %v46, %v893
  %v895 = vand.u32 %v894, 4294901760
  %v896 = vsub.f32 %v894, %v895
  %v897 = vand.u32 %v896, 4294901760
  %898 = vmatpush1.msra.mxu0 %v897
  %899 = vmatprep.subr.mxu0 0.0
  %v900 = vand.u32 %v45, 4294901760
  %v901 = vsub.f32 %v45, %v900
  %v902 = vand.u32 %v901, 4294901760
  %v903 = vsub.f32 %v901, %v902
  %v904 = vand.u32 %v903, 4294901760
  %905 = vmatpush1.msra.mxu0 %v904
  %906 = vmatprep.subr.mxu0 0.0
  %907 = vmatpush2.msra.mxu0 0.0
  %908 = vmatprep.subr.mxu0 0.0
  %909 = vmatpush2.msra.mxu0 0.0
  %910 = vmatprep.subr.mxu0 0.0
  %911 = vmatpush2.msra.mxu0 0.0
  %912 = vmatprep.subr.mxu0 0.0
  %913 = vmatpush2.msra.mxu0 0.0
  %914 = vmatprep.subr.mxu0 0.0
  %915 = vmatpush2.msra.mxu0 0.0
  %916 = vmatprep.subr.mxu0 0.0
  %917 = vmatpush2.msra.mxu0 0.0
  %918 = vmatprep.subr.mxu0 0.0
  %919 = vmatpush2.msra.mxu0 0.0
  %920 = vmatprep.subr.mxu0 0.0
  %921 = vmatpush2.msra.mxu0 0.0
  %922 = vmatprep.subr.mxu0 0.0
  %923 = vmatpush2.msra.mxu0 0.0
  %924 = vmatprep.subr.mxu0 0.0
  %925 = vmatpush2.msra.mxu0 0.0
  %926 = vmatprep.subr.mxu0 0.0
  %927 = vmatpush2.msra.mxu0 0.0
  %928 = vmatprep.subr.mxu0 0.0
  %929 = vmatpush2.msra.mxu0 0.0
  %930 = vmatprep.subr.mxu0 0.0
  %931 = vmatpush2.msra.mxu0 0.0
  %932 = vmatprep.subr.mxu0 0.0
  %933 = vmatpush2.msra.mxu0 0.0
  %934 = vmatprep.subr.mxu0 0.0
  %935 = vmatpush2.msra.mxu0 0.0
  %936 = vmatprep.subr.mxu0 0.0
  %937 = vmatpush2.msra.mxu0 0.0
  %938 = vmatprep.mubr.f32.mxu0 0.0
  %v939 = vand.u32 %v702, 4294901760
  %940 = vmatmul.mubr.f32.gmra.mxu0 %v939
  %v941 = vpop.f32.mrf.mxu0
  %v942 = vadd.f32 %v791, %v941
  %v943 = vpop.f32.mrf.mxu0
  %944 = vdwg.mxu0
  %945 = vmatprep.subr.mxu0 0.0
  %v946 = vand.u32 %v60, 4294901760
  %v947 = vsub.f32 %v60, %v946
  %948 = vmatpush1.msra.mxu0 %v947
  %949 = vmatprep.subr.mxu0 0.0
  %v950 = vand.u32 %v59, 4294901760
  %v951 = vsub.f32 %v59, %v950
  %952 = vmatpush1.msra.mxu0 %v951
  %953 = vmatprep.subr.mxu0 0.0
  %v954 = vand.u32 %v58, 4294901760
  %v955 = vsub.f32 %v58, %v954
  %956 = vmatpush1.msra.mxu0 %v955
  %957 = vmatprep.subr.mxu0 0.0
  %v958 = vand.u32 %v57, 4294901760
  %v959 = vsub.f32 %v57, %v958
  %960 = vmatpush1.msra.mxu0 %v959
  %961 = vmatprep.subr.mxu0 0.0
  %v962 = vand.u32 %v56, 4294901760
  %v963 = vsub.f32 %v56, %v962
  %964 = vmatpush1.msra.mxu0 %v963
  %965 = vmatprep.subr.mxu0 0.0
  %v966 = vand.u32 %v55, 4294901760
  %v967 = vsub.f32 %v55, %v966
  %968 = vmatpush1.msra.mxu0 %v967
  %969 = vmatprep.subr.mxu0 0.0
  %v970 = vand.u32 %v54, 4294901760
  %v971 = vsub.f32 %v54, %v970
  %972 = vmatpush1.msra.mxu0 %v971
  %973 = vmatprep.subr.mxu0 0.0
  %v974 = vand.u32 %v53, 4294901760
  %v975 = vsub.f32 %v53, %v974
  %976 = vmatpush1.msra.mxu0 %v975
  %977 = vmatprep.subr.mxu0 0.0
  %v978 = vand.u32 %v52, 4294901760
  %v979 = vsub.f32 %v52, %v978
  %980 = vmatpush1.msra.mxu0 %v979
  %981 = vmatprep.subr.mxu0 0.0
  %v982 = vand.u32 %v51, 4294901760
  %v983 = vsub.f32 %v51, %v982
  %984 = vmatpush1.msra.mxu0 %v983
  %985 = vmatprep.subr.mxu0 0.0
  %v986 = vand.u32 %v50, 4294901760
  %v987 = vsub.f32 %v50, %v986
  %988 = vmatpush1.msra.mxu0 %v987
  %989 = vmatprep.subr.mxu0 0.0
  %v990 = vand.u32 %v49, 4294901760
  %v991 = vsub.f32 %v49, %v990
  %992 = vmatpush1.msra.mxu0 %v991
  %993 = vmatprep.subr.mxu0 0.0
  %v994 = vand.u32 %v48, 4294901760
  %v995 = vsub.f32 %v48, %v994
  %996 = vmatpush1.msra.mxu0 %v995
  %997 = vmatprep.subr.mxu0 0.0
  %v998 = vand.u32 %v47, 4294901760
  %v999 = vsub.f32 %v47, %v998
  %1000 = vmatpush1.msra.mxu0 %v999
  %1001 = vmatprep.subr.mxu0 0.0
  %v1002 = vand.u32 %v46, 4294901760
  %v1003 = vsub.f32 %v46, %v1002
  %1004 = vmatpush1.msra.mxu0 %v1003
  %1005 = vmatprep.subr.mxu0 0.0
  %v1006 = vand.u32 %v45, 4294901760
  %v1007 = vsub.f32 %v45, %v1006
  %1008 = vmatpush1.msra.mxu0 %v1007
  %1009 = vmatprep.subr.mxu0 0.0
  %1010 = vmatpush2.msra.mxu0 0.0
  %1011 = vmatprep.subr.mxu0 0.0
  %1012 = vmatpush2.msra.mxu0 0.0
  %1013 = vmatprep.subr.mxu0 0.0
  %1014 = vmatpush2.msra.mxu0 0.0
  %1015 = vmatprep.subr.mxu0 0.0
  %1016 = vmatpush2.msra.mxu0 0.0
  %1017 = vmatprep.subr.mxu0 0.0
  %1018 = vmatpush2.msra.mxu0 0.0
  %1019 = vmatprep.subr.mxu0 0.0
  %1020 = vmatpush2.msra.mxu0 0.0
  %1021 = vmatprep.subr.mxu0 0.0
  %1022 = vmatpush2.msra.mxu0 0.0
  %1023 = vmatprep.subr.mxu0 0.0
  %1024 = vmatpush2.msra.mxu0 0.0
  %1025 = vmatprep.subr.mxu0 0.0
  %1026 = vmatpush2.msra.mxu0 0.0
  %1027 = vmatprep.subr.mxu0 0.0
  %1028 = vmatpush2.msra.mxu0 0.0
  %1029 = vmatprep.subr.mxu0 0.0
  %1030 = vmatpush2.msra.mxu0 0.0
  %1031 = vmatprep.subr.mxu0 0.0
  %1032 = vmatpush2.msra.mxu0 0.0
  %1033 = vmatprep.subr.mxu0 0.0
  %1034 = vmatpush2.msra.mxu0 0.0
  %1035 = vmatprep.subr.mxu0 0.0
  %1036 = vmatpush2.msra.mxu0 0.0
  %1037 = vmatprep.subr.mxu0 0.0
  %1038 = vmatpush2.msra.mxu0 0.0
  %1039 = vmatprep.subr.mxu0 0.0
  %1040 = vmatpush2.msra.mxu0 0.0
  %1041 = vmatprep.mubr.f32.mxu0 0.0
  %v1042 = vand.u32 %v702, 4294901760
  %v1043 = vsub.f32 %v702, %v1042
  %1044 = vmatmul.mubr.f32.gmra.mxu0 %v1043
  %v1045 = vpop.f32.mrf.mxu0
  %v1046 = vadd.f32 %v942, %v1045
  %v1047 = vpop.f32.mrf.mxu0
  %1048 = vdwg.mxu0
  %1049 = vmatprep.subr.mxu0 0.0
  %v1050 = vand.u32 %v60, 4294901760
  %1051 = vmatpush1.msra.mxu0 %v1050
  %1052 = vmatprep.subr.mxu0 0.0
  %v1053 = vand.u32 %v59, 4294901760
  %1054 = vmatpush1.msra.mxu0 %v1053
  %1055 = vmatprep.subr.mxu0 0.0
  %v1056 = vand.u32 %v58, 4294901760
  %1057 = vmatpush1.msra.mxu0 %v1056
  %1058 = vmatprep.subr.mxu0 0.0
  %v1059 = vand.u32 %v57, 4294901760
  %1060 = vmatpush1.msra.mxu0 %v1059
  %1061 = vmatprep.subr.mxu0 0.0
  %v1062 = vand.u32 %v56, 4294901760
  %1063 = vmatpush1.msra.mxu0 %v1062
  %1064 = vmatprep.subr.mxu0 0.0
  %v1065 = vand.u32 %v55, 4294901760
  %1066 = vmatpush1.msra.mxu0 %v1065
  %1067 = vmatprep.subr.mxu0 0.0
  %v1068 = vand.u32 %v54, 4294901760
  %1069 = vmatpush1.msra.mxu0 %v1068
  %1070 = vmatprep.subr.mxu0 0.0
  %v1071 = vand.u32 %v53, 4294901760
  %1072 = vmatpush1.msra.mxu0 %v1071
  %1073 = vmatprep.subr.mxu0 0.0
  %v1074 = vand.u32 %v52, 4294901760
  %1075 = vmatpush1.msra.mxu0 %v1074
  %1076 = vmatprep.subr.mxu0 0.0
  %v1077 = vand.u32 %v51, 4294901760
  %1078 = vmatpush1.msra.mxu0 %v1077
  %1079 = vmatprep.subr.mxu0 0.0
  %v1080 = vand.u32 %v50, 4294901760
  %1081 = vmatpush1.msra.mxu0 %v1080
  %1082 = vmatprep.subr.mxu0 0.0
  %v1083 = vand.u32 %v49, 4294901760
  %1084 = vmatpush1.msra.mxu0 %v1083
  %1085 = vmatprep.subr.mxu0 0.0
  %v1086 = vand.u32 %v48, 4294901760
  %1087 = vmatpush1.msra.mxu0 %v1086
  %1088 = vmatprep.subr.mxu0 0.0
  %v1089 = vand.u32 %v47, 4294901760
  %1090 = vmatpush1.msra.mxu0 %v1089
  %1091 = vmatprep.subr.mxu0 0.0
  %v1092 = vand.u32 %v46, 4294901760
  %1093 = vmatpush1.msra.mxu0 %v1092
  %1094 = vmatprep.subr.mxu0 0.0
  %v1095 = vand.u32 %v45, 4294901760
  %1096 = vmatpush1.msra.mxu0 %v1095
  %1097 = vmatprep.subr.mxu0 0.0
  %1098 = vmatpush2.msra.mxu0 0.0
  %1099 = vmatprep.subr.mxu0 0.0
  %1100 = vmatpush2.msra.mxu0 0.0
  %1101 = vmatprep.subr.mxu0 0.0
  %1102 = vmatpush2.msra.mxu0 0.0
  %1103 = vmatprep.subr.mxu0 0.0
  %1104 = vmatpush2.msra.mxu0 0.0
  %1105 = vmatprep.subr.mxu0 0.0
  %1106 = vmatpush2.msra.mxu0 0.0
  %1107 = vmatprep.subr.mxu0 0.0
  %1108 = vmatpush2.msra.mxu0 0.0
  %1109 = vmatprep.subr.mxu0 0.0
  %1110 = vmatpush2.msra.mxu0 0.0
  %1111 = vmatprep.subr.mxu0 0.0
  %1112 = vmatpush2.msra.mxu0 0.0
  %1113 = vmatprep.subr.mxu0 0.0
  %1114 = vmatpush2.msra.mxu0 0.0
  %1115 = vmatprep.subr.mxu0 0.0
  %1116 = vmatpush2.msra.mxu0 0.0
  %1117 = vmatprep.subr.mxu0 0.0
  %1118 = vmatpush2.msra.mxu0 0.0
  %1119 = vmatprep.subr.mxu0 0.0
  %1120 = vmatpush2.msra.mxu0 0.0
  %1121 = vmatprep.subr.mxu0 0.0
  %1122 = vmatpush2.msra.mxu0 0.0
  %1123 = vmatprep.subr.mxu0 0.0
  %1124 = vmatpush2.msra.mxu0 0.0
  %1125 = vmatprep.subr.mxu0 0.0
  %1126 = vmatpush2.msra.mxu0 0.0
  %1127 = vmatprep.subr.mxu0 0.0
  %1128 = vmatpush2.msra.mxu0 0.0
  %1129 = vmatprep.mubr.f32.mxu0 0.0
  %v1130 = vand.u32 %v702, 4294901760
  %v1131 = vsub.f32 %v702, %v1130
  %v1132 = vand.u32 %v1131, 4294901760
  %1133 = vmatmul.mubr.f32.gmra.mxu0 %v1132
  %v1134 = vpop.f32.mrf.mxu0
  %v1135 = vadd.f32 %v1046, %v1134
  %v1136 = vpop.f32.mrf.mxu0
  %1137 = vdwg.mxu0
  %1138 = vmatprep.subr.mxu0 0.0
  %v1139 = vand.u32 %v60, 4294901760
  %v1140 = vsub.f32 %v60, %v1139
  %v1141 = vand.u32 %v1140, 4294901760
  %1142 = vmatpush1.msra.mxu0 %v1141
  %1143 = vmatprep.subr.mxu0 0.0
  %v1144 = vand.u32 %v59, 4294901760
  %v1145 = vsub.f32 %v59, %v1144
  %v1146 = vand.u32 %v1145, 4294901760
  %1147 = vmatpush1.msra.mxu0 %v1146
  %1148 = vmatprep.subr.mxu0 0.0
  %v1149 = vand.u32 %v58, 4294901760
  %v1150 = vsub.f32 %v58, %v1149
  %v1151 = vand.u32 %v1150, 4294901760
  %1152 = vmatpush1.msra.mxu0 %v1151
  %1153 = vmatprep.subr.mxu0 0.0
  %v1154 = vand.u32 %v57, 4294901760
  %v1155 = vsub.f32 %v57, %v1154
  %v1156 = vand.u32 %v1155, 4294901760
  %1157 = vmatpush1.msra.mxu0 %v1156
  %1158 = vmatprep.subr.mxu0 0.0
  %v1159 = vand.u32 %v56, 4294901760
  %v1160 = vsub.f32 %v56, %v1159
  %v1161 = vand.u32 %v1160, 4294901760
  %1162 = vmatpush1.msra.mxu0 %v1161
  %1163 = vmatprep.subr.mxu0 0.0
  %v1164 = vand.u32 %v55, 4294901760
  %v1165 = vsub.f32 %v55, %v1164
  %v1166 = vand.u32 %v1165, 4294901760
  %1167 = vmatpush1.msra.mxu0 %v1166
  %1168 = vmatprep.subr.mxu0 0.0
  %v1169 = vand.u32 %v54, 4294901760
  %v1170 = vsub.f32 %v54, %v1169
  %v1171 = vand.u32 %v1170, 4294901760
  %1172 = vmatpush1.msra.mxu0 %v1171
  %1173 = vmatprep.subr.mxu0 0.0
  %v1174 = vand.u32 %v53, 4294901760
  %v1175 = vsub.f32 %v53, %v1174
  %v1176 = vand.u32 %v1175, 4294901760
  %1177 = vmatpush1.msra.mxu0 %v1176
  %1178 = vmatprep.subr.mxu0 0.0
  %v1179 = vand.u32 %v52, 4294901760
  %v1180 = vsub.f32 %v52, %v1179
  %v1181 = vand.u32 %v1180, 4294901760
  %1182 = vmatpush1.msra.mxu0 %v1181
  %1183 = vmatprep.subr.mxu0 0.0
  %v1184 = vand.u32 %v51, 4294901760
  %v1185 = vsub.f32 %v51, %v1184
  %v1186 = vand.u32 %v1185, 4294901760
  %1187 = vmatpush1.msra.mxu0 %v1186
  %1188 = vmatprep.subr.mxu0 0.0
  %v1189 = vand.u32 %v50, 4294901760
  %v1190 = vsub.f32 %v50, %v1189
  %v1191 = vand.u32 %v1190, 4294901760
  %1192 = vmatpush1.msra.mxu0 %v1191
  %1193 = vmatprep.subr.mxu0 0.0
  %v1194 = vand.u32 %v49, 4294901760
  %v1195 = vsub.f32 %v49, %v1194
  %v1196 = vand.u32 %v1195, 4294901760
  %1197 = vmatpush1.msra.mxu0 %v1196
  %1198 = vmatprep.subr.mxu0 0.0
  %v1199 = vand.u32 %v48, 4294901760
  %v1200 = vsub.f32 %v48, %v1199
  %v1201 = vand.u32 %v1200, 4294901760
  %1202 = vmatpush1.msra.mxu0 %v1201
  %1203 = vmatprep.subr.mxu0 0.0
  %v1204 = vand.u32 %v47, 4294901760
  %v1205 = vsub.f32 %v47, %v1204
  %v1206 = vand.u32 %v1205, 4294901760
  %1207 = vmatpush1.msra.mxu0 %v1206
  %1208 = vmatprep.subr.mxu0 0.0
  %v1209 = vand.u32 %v46, 4294901760
  %v1210 = vsub.f32 %v46, %v1209
  %v1211 = vand.u32 %v1210, 4294901760
  %1212 = vmatpush1.msra.mxu0 %v1211
  %1213 = vmatprep.subr.mxu0 0.0
  %v1214 = vand.u32 %v45, 4294901760
  %v1215 = vsub.f32 %v45, %v1214
  %v1216 = vand.u32 %v1215, 4294901760
  %1217 = vmatpush1.msra.mxu0 %v1216
  %1218 = vmatprep.subr.mxu0 0.0
  %1219 = vmatpush2.msra.mxu0 0.0
  %1220 = vmatprep.subr.mxu0 0.0
  %1221 = vmatpush2.msra.mxu0 0.0
  %1222 = vmatprep.subr.mxu0 0.0
  %1223 = vmatpush2.msra.mxu0 0.0
  %1224 = vmatprep.subr.mxu0 0.0
  %1225 = vmatpush2.msra.mxu0 0.0
  %1226 = vmatprep.subr.mxu0 0.0
  %1227 = vmatpush2.msra.mxu0 0.0
  %1228 = vmatprep.subr.mxu0 0.0
  %1229 = vmatpush2.msra.mxu0 0.0
  %1230 = vmatprep.subr.mxu0 0.0
  %1231 = vmatpush2.msra.mxu0 0.0
  %1232 = vmatprep.subr.mxu0 0.0
  %1233 = vmatpush2.msra.mxu0 0.0
  %1234 = vmatprep.subr.mxu0 0.0
  %1235 = vmatpush2.msra.mxu0 0.0
  %1236 = vmatprep.subr.mxu0 0.0
  %1237 = vmatpush2.msra.mxu0 0.0
  %1238 = vmatprep.subr.mxu0 0.0
  %1239 = vmatpush2.msra.mxu0 0.0
  %1240 = vmatprep.subr.mxu0 0.0
  %1241 = vmatpush2.msra.mxu0 0.0
  %1242 = vmatprep.subr.mxu0 0.0
  %1243 = vmatpush2.msra.mxu0 0.0
  %1244 = vmatprep.subr.mxu0 0.0
  %1245 = vmatpush2.msra.mxu0 0.0
  %1246 = vmatprep.subr.mxu0 0.0
  %1247 = vmatpush2.msra.mxu0 0.0
  %1248 = vmatprep.subr.mxu0 0.0
  %1249 = vmatpush2.msra.mxu0 0.0
  %1250 = vmatprep.mubr.f32.mxu0 0.0
  %v1251 = vand.u32 %v702, 4294901760
  %1252 = vmatmul.mubr.f32.gmra.mxu0 %v1251
  %v1253 = vpop.f32.mrf.mxu0
  %v1254 = vadd.f32 %v1135, %v1253
  %v1255 = vpop.f32.mrf.mxu0
  %1256 = vdwg.mxu0
  %1257 = vmatprep.subr.mxu0 0.0
  %v1258 = vand.u32 %v60, 4294901760
  %1259 = vmatpush1.msra.mxu0 %v1258
  %1260 = vmatprep.subr.mxu0 0.0
  %v1261 = vand.u32 %v59, 4294901760
  %1262 = vmatpush1.msra.mxu0 %v1261
  %1263 = vmatprep.subr.mxu0 0.0
  %v1264 = vand.u32 %v58, 4294901760
  %1265 = vmatpush1.msra.mxu0 %v1264
  %1266 = vmatprep.subr.mxu0 0.0
  %v1267 = vand.u32 %v57, 4294901760
  %1268 = vmatpush1.msra.mxu0 %v1267
  %1269 = vmatprep.subr.mxu0 0.0
  %v1270 = vand.u32 %v56, 4294901760
  %1271 = vmatpush1.msra.mxu0 %v1270
  %1272 = vmatprep.subr.mxu0 0.0
  %v1273 = vand.u32 %v55, 4294901760
  %1274 = vmatpush1.msra.mxu0 %v1273
  %1275 = vmatprep.subr.mxu0 0.0
  %v1276 = vand.u32 %v54, 4294901760
  %1277 = vmatpush1.msra.mxu0 %v1276
  %1278 = vmatprep.subr.mxu0 0.0
  %v1279 = vand.u32 %v53, 4294901760
  %1280 = vmatpush1.msra.mxu0 %v1279
  %1281 = vmatprep.subr.mxu0 0.0
  %v1282 = vand.u32 %v52, 4294901760
  %1283 = vmatpush1.msra.mxu0 %v1282
  %1284 = vmatprep.subr.mxu0 0.0
  %v1285 = vand.u32 %v51, 4294901760
  %1286 = vmatpush1.msra.mxu0 %v1285
  %1287 = vmatprep.subr.mxu0 0.0
  %v1288 = vand.u32 %v50, 4294901760
  %1289 = vmatpush1.msra.mxu0 %v1288
  %1290 = vmatprep.subr.mxu0 0.0
  %v1291 = vand.u32 %v49, 4294901760
  %1292 = vmatpush1.msra.mxu0 %v1291
  %1293 = vmatprep.subr.mxu0 0.0
  %v1294 = vand.u32 %v48, 4294901760
  %1295 = vmatpush1.msra.mxu0 %v1294
  %1296 = vmatprep.subr.mxu0 0.0
  %v1297 = vand.u32 %v47, 4294901760
  %1298 = vmatpush1.msra.mxu0 %v1297
  %1299 = vmatprep.subr.mxu0 0.0
  %v1300 = vand.u32 %v46, 4294901760
  %1301 = vmatpush1.msra.mxu0 %v1300
  %1302 = vmatprep.subr.mxu0 0.0
  %v1303 = vand.u32 %v45, 4294901760
  %1304 = vmatpush1.msra.mxu0 %v1303
  %1305 = vmatprep.subr.mxu0 0.0
  %1306 = vmatpush2.msra.mxu0 0.0
  %1307 = vmatprep.subr.mxu0 0.0
  %1308 = vmatpush2.msra.mxu0 0.0
  %1309 = vmatprep.subr.mxu0 0.0
  %1310 = vmatpush2.msra.mxu0 0.0
  %1311 = vmatprep.subr.mxu0 0.0
  %1312 = vmatpush2.msra.mxu0 0.0
  %1313 = vmatprep.subr.mxu0 0.0
  %1314 = vmatpush2.msra.mxu0 0.0
  %1315 = vmatprep.subr.mxu0 0.0
  %1316 = vmatpush2.msra.mxu0 0.0
  %1317 = vmatprep.subr.mxu0 0.0
  %1318 = vmatpush2.msra.mxu0 0.0
  %1319 = vmatprep.subr.mxu0 0.0
  %1320 = vmatpush2.msra.mxu0 0.0
  %1321 = vmatprep.subr.mxu0 0.0
  %1322 = vmatpush2.msra.mxu0 0.0
  %1323 = vmatprep.subr.mxu0 0.0
  %1324 = vmatpush2.msra.mxu0 0.0
  %1325 = vmatprep.subr.mxu0 0.0
  %1326 = vmatpush2.msra.mxu0 0.0
  %1327 = vmatprep.subr.mxu0 0.0
  %1328 = vmatpush2.msra.mxu0 0.0
  %1329 = vmatprep.subr.mxu0 0.0
  %1330 = vmatpush2.msra.mxu0 0.0
  %1331 = vmatprep.subr.mxu0 0.0
  %1332 = vmatpush2.msra.mxu0 0.0
  %1333 = vmatprep.subr.mxu0 0.0
  %1334 = vmatpush2.msra.mxu0 0.0
  %1335 = vmatprep.subr.mxu0 0.0
  %1336 = vmatpush2.msra.mxu0 0.0
  %1337 = vmatprep.mubr.f32.mxu0 0.0
  %v1338 = vand.u32 %v702, 4294901760
  %1339 = vmatmul.mubr.f32.gmra.mxu0 %v1338
  %v1340 = vpop.f32.mrf.mxu0
  %v1341 = vadd.f32 %v1254, %v1340
  %v1342 = vpop.f32.mrf.mxu0
  %1343 = vdwg.mxu0
  %v1344 = vmul.f32 %v699, %v699
  %v1345 = vmul.f32 %v1344, 0.1
  %v1346 = vsub.f32 %v1341, %v1345
  %v1347 = vmul.f32 %v1346, 0.11111111
  %v1348 = vmax.f32 %v1347, 0.0
  %vm1349 = vcmp.lt.s32.totalorder %v20, 119
  %v1350 = vsel %vm1349, 1, 0
  %vm1351 = vcmp.eq.s32.totalorder %v1350, 1
  %v1352 = vsel %vm1351, %v1348, 0.0
  %v1353 = vsel %vm38, %v1352, -inf
  %1354 = vmax.xlane.f32.xlu0 %v1353
  %v1355 = vpop.xlane.xlu0 %1354
  %1356 = vrot.lane.b32.xlu0 %v1348, 5
  %v1357 = vpop.permute.xlu0 %1356
  %vm1358 = vcmp.lt.s32.totalorder %v20, 5
  %vm1359 = vcmp.ge.s32.totalorder %v20, 124
  %v1360 = vsel %vm1359, 1, 0
  %vm1361 = vcmp.eq.s32.totalorder %v1360, 1
  %1363 = vset.pattern.permute.xlu0 118
  %1364 = vperm.xlu0 %1363, %v1348
  %v1365 = vpop.permute.xlu0 %1364
  %v1367 = vsel %vm1361, %v1365, %v1357
  %v1368 = vsel %vm1358, 1, 0
  %vm1369 = vcmp.eq.s32.totalorder %v1368, 1
  %1370 = vset.pattern.permute.xlu0 0
  %1371 = vperm.xlu0 %1370, %v1348
  %v1372 = vpop.permute.xlu0 %1371
  %v1374 = vsel %vm1369, %v1372, %v1367
  %v1375 = vadd.f32 %v1355, 1e-08
  %v1376 = vmul.f32 %v1375, 0.1
  %vm1377 = vcmp.lt.f32.partialorder %v1374, %v1376
  %v1378 = vsel %vm1377, 1, 0
  %v1379 = vcvt.s32.f32 %v1378
  %1380 = vrot.lane.b32.xlu0 %v1379, 127
  %v1381 = vpop.permute.xlu0 %1380
  %v1382 = vmul.f32 %v28, %v1381
  %v1383 = vmul.f32 %v1382, %v1382
  %v1384 = vmul.f32 %v1383, 0.0003937008
  %v1385 = vadd.f32 %v37, %v1384
  %v1386 = vsub.f32 %v28, %v1382
  %v1387 = vmax.f32 %v33, 0.15
  %v1388 = vsub.f32 %v1386, %v1387
  %v1389 = vmax.f32 %v1388, 0.0
  %v1390 = vmul.f32 %v1389, %v1389
  %v1391 = vmul.f32 %v1390, 9.84252e-05
  %v1392 = vadd.f32 %v1385, %v1391
  %v1393 = vsel %vm38, %v1392, 0.0
  %1394 = vadd.xlane.f32.xlu0 %v1393
  %v1395 = vpop.xlane.xlu0 %1394
  %v1396 = vrot.slane %v1395, 4
  %v1397 = vadd.f32 %v1395, %v1396
  %v1398 = vrot.slane %v1397, 2
  %v1399 = vadd.f32 %v1397, %v1398
  %v1400 = vrot.slane %v1399, 1
  %v1401 = vadd.f32 %v1399, %v1400
  %s1402 = vtos %v1401
  %v1403 = vstv %s1402
  %1404 = vst [vmem:[%s3] sm:$0xff] %v1403
  // Predicated region
  $region14: #{adaptive_gradient_constraint_loss.1} parent=0 // pred_check
    _
  $region15: #{adaptive_gradient_constraint_loss.1} parent=0 // pred_check_branch
    %1406 = sbr.rel (0) target = $region17
  $region16: #{adaptive_gradient_constraint_loss.1} parent=0 // pred_region
    _
  $region17: #{adaptive_gradient_constraint_loss.1} parent=0 // pred_fallthru
    _
  // Predicated region
  $region18: #{adaptive_gradient_constraint_loss.1} parent=0 // pred_check
    _
  $region19: #{adaptive_gradient_constraint_loss.1} parent=0 // pred_check_branch
    %1408 = sbr.rel (0) target = $region21
  $region20: #{adaptive_gradient_constraint_loss.1} parent=0 // pred_region
    _
  $region21: #{adaptive_gradient_constraint_loss.1} parent=0 // pred_fallthru
    _

</llo_original>
